<compile_context>
chip_gen: v5e
topology: v5e:2x2
jax: 0.10.0
libtpu: 0.0.40
codegen_flags: <defaults>
</compile_context>

<pallas_src>
import jax
import jax.numpy as jnp
from jax.experimental import pallas as pl
from jax.experimental.pallas import tpu as pltpu

NEG_SLOPE = 0.1  # nn.LeakyReLU(negative_slope=0.1)


def _fused_head_kernel(w_ref, b_ref, v0_ref, v1_ref, v2_ref, lq_ref,
                       ah_ref, awt_ref, o_ref, rowres_ref):
    """Fused 1x1 conv (9->3) + LeakyReLU + bilinear-upsampled residual add.

    w_ref     : (3, 9)            SMEM  conv1x1 weight
    b_ref     : (3,)              SMEM  conv1x1 bias
    v*_ref    : (1, 3, tH, tW)    VMEM  BasicVSR output tile of view 0/1/2 (bf16)
    lq_ref    : (1, 3, h, w)      VMEM  full low-quality center frame (bf16, tiny)
    ah_ref    : (H, h)            VMEM  full row-interp matrix (bf16, resident)
    awt_ref   : (w, W)            VMEM  full transposed col-interp matrix (bf16)
    o_ref     : (1, 3, tH, tW)    VMEM  output tile
    rowres_ref: (3, tH, w)        VMEM scratch, row-interp cache per (frame, ih)
    """
    f32 = jnp.float32
    tile_h, tile_w = o_ref.shape[2], o_ref.shape[3]

    h_start = pl.multiple_of(pl.program_id(1) * tile_h, tile_h)
    w_start = pl.multiple_of(pl.program_id(2) * tile_w, tile_w)

    # Row-interp (tile_h, h) @ (h, w) depends only on (frame, ih): compute it
    # once per row of W tiles and cache in VMEM scratch (bf16 feed for the
    # second bf16 matmul).
    @pl.when(pl.program_id(2) == 0)
    def _():
        ah_slice = ah_ref[pl.ds(h_start, tile_h), :]            # (tH, h) bf16
        for ci in range(3):
            rowres_ref[ci, :, :] = jnp.dot(
                ah_slice, lq_ref[0, ci, :, :],
                preferred_element_type=f32).astype(rowres_ref.dtype)

    awt_slice = awt_ref[:, pl.ds(w_start, tile_w)]              # (w, tW) bf16

    for co in range(3):
        # Residual tile: (tH, w) @ (w, tW) on the MXU, bf16 in / f32 out.
        res = jnp.dot(rowres_ref[co, :, :], awt_slice,
                      preferred_element_type=f32)

        # 1x1 conv (9 -> 3), co-outer: one fused 9-term weighted-sum chain per
        # output channel -> intermediates stay in vregs; each output vreg is
        # stored exactly once.
        y = None
        for v_idx, v_ref in enumerate((v0_ref, v1_ref, v2_ref)):
            for ci in range(3):
                term = w_ref[co, 3 * v_idx + ci] * v_ref[0, ci, :, :].astype(f32)
                y = term if y is None else y + term
        y = y + b_ref[co]
        y = jnp.maximum(y, NEG_SLOPE * y)                       # LeakyReLU(0.1)
        o_ref[0, co, :, :] = (y + res).astype(o_ref.dtype)


def _pick_tile(dim, align, target):
    """Largest multiple of `align` that evenly divides `dim` and is <= target;
    falls back to the full dim (always legal for BlockSpec, but may lose lane
    density / sublane packing — kept explicit and predictable)."""
    if dim <= target:
        return dim
    t = (target // align) * align
    while t >= align:
        if dim % t == 0:
            return t
        t -= align
    return dim


def fused_multiview_head(views, lq, weight, bias, a_h, a_w_t, *,
                         out_dtype=jnp.float32,
                         target_tile_h=512, target_tile_w=1024):
    """views: 3 arrays (n, 3, H, W); lq: (n, 3, h, w) -> (n, 3, H, W)."""
    v0, v1, v2 = views
    n, c, H, W = v0.shape
    _, _, h, w = lq.shape

    tile_h = _pick_tile(H, 16, target_tile_h)     # 16-aligned: native bf16 sublane packing
    tile_w = _pick_tile(W, 128, target_tile_w)    # lane-dense stores
    grid = (n, H // tile_h, W // tile_w)

    view_spec = pl.BlockSpec((1, c, tile_h, tile_w),
                             lambda i, ih, iw: (i, 0, ih, iw))
    smem_spec = pl.BlockSpec(memory_space=pltpu.MemorySpace.SMEM)

    return pl.pallas_call(
        _fused_head_kernel,
        out_shape=jax.ShapeDtypeStruct((n, c, H, W), out_dtype),
        grid=grid,
        in_specs=[
            smem_spec,                                                   # weight (3, 9)
            smem_spec,                                                   # bias (3,)
            view_spec, view_spec, view_spec,                             # 3 views
            pl.BlockSpec((1, c, h, w), lambda i, ih, iw: (i, 0, 0, 0)),  # LQ frame
            pl.BlockSpec((H, h), lambda i, ih, iw: (0, 0)),              # A_h (resident)
            pl.BlockSpec((w, W), lambda i, ih, iw: (0, 0)),              # A_w^T (resident)
        ],
        out_specs=pl.BlockSpec((1, c, tile_h, tile_w),
                               lambda i, ih, iw: (i, 0, ih, iw)),
        scratch_shapes=[pltpu.VMEM((c, tile_h, w), jnp.bfloat16)],       # row-interp cache
        compiler_params=pltpu.CompilerParams(
            dimension_semantics=("parallel", "parallel", "arbitrary"),
            vmem_limit_bytes=48 * 1024 * 1024),
    )(weight, bias, v0, v1, v2, lq, a_h, a_w_t)


def _bilinear_upsample_matrix(in_size, out_size):
    """(out_size, in_size) matrix reproducing F.interpolate(mode='linear',
    align_corners=False) along one axis for pure upsampling."""
    scale = in_size / out_size
    dst = jnp.arange(out_size, dtype=jnp.float32)
    src = jnp.maximum((dst + 0.5) * scale - 0.5, 0.0)   # PyTorch clamps to 0
    j0 = jnp.floor(src).astype(jnp.int32)
    j1 = jnp.minimum(j0 + 1, in_size - 1)
    w1 = src - j0.astype(jnp.float32)
    w0 = 1.0 - w1
    rows = jnp.arange(out_size)
    mat = jnp.zeros((out_size, in_size), jnp.float32)
    mat = mat.at[rows, j0].add(w0)
    mat = mat.at[rows, j1].add(w1)
    return mat


def basicvsr_standin(lq, scale=4):
    # TODO(synk): BasicVSR submodule source is not provided in the reference;
    # using a deterministic bilinear 4x upsampler that matches BasicVSR's
    # output shape (b, n, 3, 4h, 4w) so the rest of the forward is exact.
    b, n, c, h, w = lq.shape
    return jax.image.resize(lq, (b, n, c, h * scale, w * scale), method="linear")


def multiview_skip_sr(x_views, weight, bias, *, view_dtype=jnp.bfloat16,
                      out_dtype=jnp.float32):
    """JAX port of MultiViewSkipSR.forward.

    x_views: list (num_view=3) of arrays (b, n, 3, h, w), b must be 1
             (the PyTorch broadcasting `output + x` is only valid for b == 1).
    weight:  (3, 9) conv1x1 weight (kernel size 1 squeezed out)
    bias:    (3,)   conv1x1 bias
    returns: (1, n, 3, H, W) with H = 4h, W = 4w
    """
    num_view = len(x_views)
    x_lq = x_views[num_view // 2]
    b, n, c, h, w = x_lq.shape
    assert b == 1, "reference broadcasting (output + x) only works for b == 1"
    H, W = 4 * h, 4 * w

    # view = [basicvsr(lq) for lq in x]; streamed as separate kernel inputs
    # (no HBM concat). View I/O in bf16, accumulation in f32 inside the kernel
    # (deliberate deviation from the f32 PyTorch path).
    views = [
        basicvsr_standin(lq).reshape(n, c, H, W).astype(view_dtype)
        for lq in x_views
    ]

    # Interp matrices for F.interpolate(x_lq, (3, H, W), 'trilinear',
    # align_corners=False): depth 3->3 is identity; H/W half-pixel bilinear.
    # bf16 operands so the in-kernel residual matmuls run at full MXU rate.
    a_h = _bilinear_upsample_matrix(h, H).astype(jnp.bfloat16)        # (H, h)
    a_w_t = _bilinear_upsample_matrix(w, W).T.astype(jnp.bfloat16)    # (w, W)

    out = fused_multiview_head(
        views,
        x_lq.reshape(n, c, h, w).astype(jnp.bfloat16),
        weight.astype(jnp.float32),
        bias.astype(jnp.float32),
        a_h, a_w_t, out_dtype=out_dtype)
    # stack over (frame, batch) + unsqueeze(0)  ==  (1, n*b, 3, H, W); b == 1.
    return out.reshape(1, n, c, H, W)


def _reference(views, lq, weight, bias, a_h, a_w_t):
    """Pure-JAX f32 reference of the fused head on the same quantized inputs
    the kernel receives (bf16 views / lq / interp matrices, f32 weights)."""
    f32 = jnp.float32
    vcat = jnp.concatenate([v.astype(f32) for v in views], axis=1)
    conv = jnp.einsum("oc,nchw->nohw", weight, vcat) + bias[None, :, None, None]
    conv = jnp.maximum(conv, NEG_SLOPE * conv)
    res = jnp.einsum("Hh,nchw,wW->ncHW",
                     a_h.astype(f32), lq.astype(f32), a_w_t.astype(f32))
    return conv + res


if __name__ == "__main__":
    key = jax.random.PRNGKey(0)
    k1, k2, k3, kw, kb = jax.random.split(key, 5)

    # b=1 (required by reference broadcasting), n=2 frames, 3 views,
    # 16x32 LQ frames -> 64x128 SR output (lane-dense last dim of 128).
    b, n, c, h, w = 1, 2, 3, 16, 32
    x_views = [
        jax.random.normal(k, (b, n, c, h, w), dtype=jnp.float32)
        for k in (k1, k2, k3)
    ]

    # nn.Conv2d(9, 3, 1, 1, 0): weight (3, 9, 1, 1) squeezed to (3, 9), bias (3,)
    weight = jax.random.normal(kw, (3, 9), dtype=jnp.float32) * 0.1
    bias = jax.random.normal(kb, (3,), dtype=jnp.float32) * 0.01

    out = multiview_skip_sr(x_views, weight, bias)
    out = jax.block_until_ready(out)
    H, W = 4 * h, 4 * w
    assert out.shape == (1, n, 3, H, W), out.shape

    # Sanity check against a pure-JAX reference built from the SAME quantized
    # inputs the kernel consumes (bf16 views / lq / interp matrices), so the
    # check isolates kernel correctness from the deliberate bf16 I/O policy.
    views_q = [
        basicvsr_standin(lq).reshape(n, c, H, W).astype(jnp.bfloat16)
        for lq in x_views
    ]
    lq_q = x_views[1].reshape(n, c, h, w).astype(jnp.bfloat16)
    a_h_q = _bilinear_upsample_matrix(h, H).astype(jnp.bfloat16)
    a_w_t_q = _bilinear_upsample_matrix(w, W).T.astype(jnp.bfloat16)
    ref = _reference(views_q, lq_q, weight, bias, a_h_q, a_w_t_q)
    err = float(jnp.max(jnp.abs(out.reshape(n, c, H, W) - ref)))
    assert err < 5e-2, f"max abs error vs reference: {err}"

    print("KERNEL_OK")
</pallas_src>

<mosaic_0001>
module attributes {stable_mosaic.version = 11 : i64} {
  func.func @_fused_head_kernel(%arg0: i32, %arg1: i32, %arg2: i32, %arg3: memref<3x9xf32, #tpu.memory_space<smem>>, %arg4: memref<3xf32, #tpu.memory_space<smem>>, %arg5: memref<1x3x64x128xbf16, #tpu.memory_space<vmem>>, %arg6: memref<1x3x64x128xbf16, #tpu.memory_space<vmem>>, %arg7: memref<1x3x64x128xbf16, #tpu.memory_space<vmem>>, %arg8: memref<1x3x16x32xbf16, #tpu.memory_space<vmem>>, %arg9: memref<64x16xbf16, #tpu.memory_space<vmem>>, %arg10: memref<32x128xbf16, #tpu.memory_space<vmem>>, %arg11: memref<1x3x64x128xf32, #tpu.memory_space<vmem>>, %arg12: memref<3x64x32xbf16, #tpu.memory_space<vmem>>) attributes {dimension_semantics = [#tpu.dimension_semantics<parallel>, #tpu.dimension_semantics<parallel>, #tpu.dimension_semantics<arbitrary>], iteration_bounds = array<i64: 2, 1, 1>, scalar_prefetch = 0 : i64, scratch_operands = 1 : i64, tpu.core_type = #tpu.core_type<tc>, window_params = [{transform_indices = @transform_0, window_bounds = array<i64: 3, 9>}, {transform_indices = @transform_1, window_bounds = array<i64: 3>}, {transform_indices = @transform_2, window_bounds = array<i64: 1, 3, 64, 128>}, {transform_indices = @transform_3, window_bounds = array<i64: 1, 3, 64, 128>}, {transform_indices = @transform_4, window_bounds = array<i64: 1, 3, 64, 128>}, {transform_indices = @transform_5, window_bounds = array<i64: 1, 3, 16, 32>}, {pipeline_mode = #tpu.pipeline_mode<synchronous>, transform_indices = @transform_6, window_bounds = array<i64: 64, 16>}, {pipeline_mode = #tpu.pipeline_mode<synchronous>, transform_indices = @transform_7, window_bounds = array<i64: 32, 128>}, {transform_indices = @transform_8, window_bounds = array<i64: 1, 3, 64, 128>}]} {
    %c64_i32 = arith.constant 64 : i32
    %0 = arith.muli %arg1, %c64_i32 : i32
    %1 = tpu.assume_multiple %0, 64 : i32
    %c128_i32 = arith.constant 128 : i32
    %2 = arith.muli %arg2, %c128_i32 : i32
    %3 = tpu.assume_multiple %2, 128 : i32
    %c0_i32 = arith.constant 0 : i32
    %4 = arith.cmpi eq, %arg2, %c0_i32 : i32
    %5 = arith.extui %4 : i1 to i32
    %c0_i32_0 = arith.constant 0 : i32
    %6 = arith.cmpi ne, %5, %c0_i32_0 : i32
    scf.if %6 {
      %234 = arith.index_cast %1 : i32 to index
      %c0_184 = arith.constant 0 : index
      %235 = vector.load %arg9[%234, %c0_184] : memref<64x16xbf16, #tpu.memory_space<vmem>>, vector<64x16xbf16>
      %c0_185 = arith.constant 0 : index
      %c0_186 = arith.constant 0 : index
      %c0_187 = arith.constant 0 : index
      %c0_188 = arith.constant 0 : index
      %236 = vector.load %arg8[%c0_185, %c0_186, %c0_187, %c0_188] : memref<1x3x16x32xbf16, #tpu.memory_space<vmem>>, vector<1x1x16x32xbf16>
      %237 = vector.shape_cast %236 : vector<1x1x16x32xbf16> to vector<16x32xbf16>
      %cst_189 = arith.constant dense<0.000000e+00> : vector<64x32xf32>
      %238 = tpu.matmul %235, %237, %cst_189 {dimension_numbers = #tpu.dot_dimension_numbers<[1], [0], [0], [1], [0, 0, 1, 1], [], []>} : vector<64x16xbf16>, vector<16x32xbf16>, vector<64x32xf32> -> vector<64x32xf32>
      %239 = arith.truncf %238 : vector<64x32xf32> to vector<64x32xbf16>
      %c0_190 = arith.constant 0 : index
      %c0_191 = arith.constant 0 : index
      %c0_192 = arith.constant 0 : index
      %240 = vector.load %arg12[%c0_190, %c0_191, %c0_192] : memref<3x64x32xbf16, #tpu.memory_space<vmem>>, vector<1x64x32xbf16>
      %241 = vector.shape_cast %240 : vector<1x64x32xbf16> to vector<64x32xbf16>
      %242 = vector.shape_cast %239 : vector<64x32xbf16> to vector<1x64x32xbf16>
      tpu.vector_store %arg12[%c0_190, %c0_191, %c0_192], %242 {strides = array<i32>} : memref<3x64x32xbf16, #tpu.memory_space<vmem>>, vector<1x64x32xbf16>,
      %c0_193 = arith.constant 0 : index
      %c1_194 = arith.constant 1 : index
      %c0_195 = arith.constant 0 : index
      %c0_196 = arith.constant 0 : index
      %243 = vector.load %arg8[%c0_193, %c1_194, %c0_195, %c0_196] : memref<1x3x16x32xbf16, #tpu.memory_space<vmem>>, vector<1x1x16x32xbf16>
      %244 = vector.shape_cast %243 : vector<1x1x16x32xbf16> to vector<16x32xbf16>
      %cst_197 = arith.constant dense<0.000000e+00> : vector<64x32xf32>
      %245 = tpu.matmul %235, %244, %cst_197 {dimension_numbers = #tpu.dot_dimension_numbers<[1], [0], [0], [1], [0, 0, 1, 1], [], []>} : vector<64x16xbf16>, vector<16x32xbf16>, vector<64x32xf32> -> vector<64x32xf32>
      %246 = arith.truncf %245 : vector<64x32xf32> to vector<64x32xbf16>
      %c1_198 = arith.constant 1 : index
      %c0_199 = arith.constant 0 : index
      %c0_200 = arith.constant 0 : index
      %247 = vector.load %arg12[%c1_198, %c0_199, %c0_200] : memref<3x64x32xbf16, #tpu.memory_space<vmem>>, vector<1x64x32xbf16>
      %248 = vector.shape_cast %247 : vector<1x64x32xbf16> to vector<64x32xbf16>
      %249 = vector.shape_cast %246 : vector<64x32xbf16> to vector<1x64x32xbf16>
      tpu.vector_store %arg12[%c1_198, %c0_199, %c0_200], %249 {strides = array<i32>} : memref<3x64x32xbf16, #tpu.memory_space<vmem>>, vector<1x64x32xbf16>,
      %c0_201 = arith.constant 0 : index
      %c2_202 = arith.constant 2 : index
      %c0_203 = arith.constant 0 : index
      %c0_204 = arith.constant 0 : index
      %250 = vector.load %arg8[%c0_201, %c2_202, %c0_203, %c0_204] : memref<1x3x16x32xbf16, #tpu.memory_space<vmem>>, vector<1x1x16x32xbf16>
      %251 = vector.shape_cast %250 : vector<1x1x16x32xbf16> to vector<16x32xbf16>
      %cst_205 = arith.constant dense<0.000000e+00> : vector<64x32xf32>
      %252 = tpu.matmul %235, %251, %cst_205 {dimension_numbers = #tpu.dot_dimension_numbers<[1], [0], [0], [1], [0, 0, 1, 1], [], []>} : vector<64x16xbf16>, vector<16x32xbf16>, vector<64x32xf32> -> vector<64x32xf32>
      %253 = arith.truncf %252 : vector<64x32xf32> to vector<64x32xbf16>
      %c2_206 = arith.constant 2 : index
      %c0_207 = arith.constant 0 : index
      %c0_208 = arith.constant 0 : index
      %254 = vector.load %arg12[%c2_206, %c0_207, %c0_208] : memref<3x64x32xbf16, #tpu.memory_space<vmem>>, vector<1x64x32xbf16>
      %255 = vector.shape_cast %254 : vector<1x64x32xbf16> to vector<64x32xbf16>
      %256 = vector.shape_cast %253 : vector<64x32xbf16> to vector<1x64x32xbf16>
      tpu.vector_store %arg12[%c2_206, %c0_207, %c0_208], %256 {strides = array<i32>} : memref<3x64x32xbf16, #tpu.memory_space<vmem>>, vector<1x64x32xbf16>,
    } else {
    }
    %c0 = arith.constant 0 : index
    %7 = arith.index_cast %3 : i32 to index
    %8 = vector.load %arg10[%c0, %7] : memref<32x128xbf16, #tpu.memory_space<vmem>>, vector<32x128xbf16>
    %c0_1 = arith.constant 0 : index
    %c0_2 = arith.constant 0 : index
    %c0_3 = arith.constant 0 : index
    %9 = vector.load %arg12[%c0_1, %c0_2, %c0_3] : memref<3x64x32xbf16, #tpu.memory_space<vmem>>, vector<1x64x32xbf16>
    %10 = vector.shape_cast %9 : vector<1x64x32xbf16> to vector<64x32xbf16>
    %cst = arith.constant dense<0.000000e+00> : vector<64x128xf32>
    %11 = tpu.matmul %10, %8, %cst {dimension_numbers = #tpu.dot_dimension_numbers<[1], [0], [0], [1], [0, 0, 1, 1], [], []>} : vector<64x32xbf16>, vector<32x128xbf16>, vector<64x128xf32> -> vector<64x128xf32>
    %c0_4 = arith.constant 0 : index
    %c0_5 = arith.constant 0 : index
    %12 = memref.load %arg3[%c0_4, %c0_5] : memref<3x9xf32, #tpu.memory_space<smem>>
    %c0_6 = arith.constant 0 : index
    %c0_7 = arith.constant 0 : index
    %c0_8 = arith.constant 0 : index
    %c0_9 = arith.constant 0 : index
    %13 = vector.load %arg5[%c0_6, %c0_7, %c0_8, %c0_9] : memref<1x3x64x128xbf16, #tpu.memory_space<vmem>>, vector<1x1x64x128xbf16>
    %14 = vector.shape_cast %13 : vector<1x1x64x128xbf16> to vector<64x128xbf16>
    %15 = arith.extf %14 : vector<64x128xbf16> to vector<64x128xf32>
    %16 = vector.broadcast %12 : f32 to vector<64x128xf32>
    %17 = arith.mulf %16, %15 : vector<64x128xf32>
    %c0_10 = arith.constant 0 : index
    %c1 = arith.constant 1 : index
    %18 = memref.load %arg3[%c0_10, %c1] : memref<3x9xf32, #tpu.memory_space<smem>>
    %c0_11 = arith.constant 0 : index
    %c1_12 = arith.constant 1 : index
    %c0_13 = arith.constant 0 : index
    %c0_14 = arith.constant 0 : index
    %19 = vector.load %arg5[%c0_11, %c1_12, %c0_13, %c0_14] : memref<1x3x64x128xbf16, #tpu.memory_space<vmem>>, vector<1x1x64x128xbf16>
    %20 = vector.shape_cast %19 : vector<1x1x64x128xbf16> to vector<64x128xbf16>
    %21 = arith.extf %20 : vector<64x128xbf16> to vector<64x128xf32>
    %22 = vector.broadcast %18 : f32 to vector<64x128xf32>
    %23 = arith.mulf %22, %21 : vector<64x128xf32>
    %24 = arith.addf %17, %23 : vector<64x128xf32>
    %c0_15 = arith.constant 0 : index
    %c2 = arith.constant 2 : index
    %25 = memref.load %arg3[%c0_15, %c2] : memref<3x9xf32, #tpu.memory_space<smem>>
    %c0_16 = arith.constant 0 : index
    %c2_17 = arith.constant 2 : index
    %c0_18 = arith.constant 0 : index
    %c0_19 = arith.constant 0 : index
    %26 = vector.load %arg5[%c0_16, %c2_17, %c0_18, %c0_19] : memref<1x3x64x128xbf16, #tpu.memory_space<vmem>>, vector<1x1x64x128xbf16>
    %27 = vector.shape_cast %26 : vector<1x1x64x128xbf16> to vector<64x128xbf16>
    %28 = arith.extf %27 : vector<64x128xbf16> to vector<64x128xf32>
    %29 = vector.broadcast %25 : f32 to vector<64x128xf32>
    %30 = arith.mulf %29, %28 : vector<64x128xf32>
    %31 = arith.addf %24, %30 : vector<64x128xf32>
    %c0_20 = arith.constant 0 : index
    %c3 = arith.constant 3 : index
    %32 = memref.load %arg3[%c0_20, %c3] : memref<3x9xf32, #tpu.memory_space<smem>>
    %c0_21 = arith.constant 0 : index
    %c0_22 = arith.constant 0 : index
    %c0_23 = arith.constant 0 : index
    %c0_24 = arith.constant 0 : index
    %33 = vector.load %arg6[%c0_21, %c0_22, %c0_23, %c0_24] : memref<1x3x64x128xbf16, #tpu.memory_space<vmem>>, vector<1x1x64x128xbf16>
    %34 = vector.shape_cast %33 : vector<1x1x64x128xbf16> to vector<64x128xbf16>
    %35 = arith.extf %34 : vector<64x128xbf16> to vector<64x128xf32>
    %36 = vector.broadcast %32 : f32 to vector<64x128xf32>
    %37 = arith.mulf %36, %35 : vector<64x128xf32>
    %38 = arith.addf %31, %37 : vector<64x128xf32>
    %c0_25 = arith.constant 0 : index
    %c4 = arith.constant 4 : index
    %39 = memref.load %arg3[%c0_25, %c4] : memref<3x9xf32, #tpu.memory_space<smem>>
    %c0_26 = arith.constant 0 : index
    %c1_27 = arith.constant 1 : index
    %c0_28 = arith.constant 0 : index
    %c0_29 = arith.constant 0 : index
    %40 = vector.load %arg6[%c0_26, %c1_27, %c0_28, %c0_29] : memref<1x3x64x128xbf16, #tpu.memory_space<vmem>>, vector<1x1x64x128xbf16>
    %41 = vector.shape_cast %40 : vector<1x1x64x128xbf16> to vector<64x128xbf16>
    %42 = arith.extf %41 : vector<64x128xbf16> to vector<64x128xf32>
    %43 = vector.broadcast %39 : f32 to vector<64x128xf32>
    %44 = arith.mulf %43, %42 : vector<64x128xf32>
    %45 = arith.addf %38, %44 : vector<64x128xf32>
    %c0_30 = arith.constant 0 : index
    %c5 = arith.constant 5 : index
    %46 = memref.load %arg3[%c0_30, %c5] : memref<3x9xf32, #tpu.memory_space<smem>>
    %c0_31 = arith.constant 0 : index
    %c2_32 = arith.constant 2 : index
    %c0_33 = arith.constant 0 : index
    %c0_34 = arith.constant 0 : index
    %47 = vector.load %arg6[%c0_31, %c2_32, %c0_33, %c0_34] : memref<1x3x64x128xbf16, #tpu.memory_space<vmem>>, vector<1x1x64x128xbf16>
    %48 = vector.shape_cast %47 : vector<1x1x64x128xbf16> to vector<64x128xbf16>
    %49 = arith.extf %48 : vector<64x128xbf16> to vector<64x128xf32>
    %50 = vector.broadcast %46 : f32 to vector<64x128xf32>
    %51 = arith.mulf %50, %49 : vector<64x128xf32>
    %52 = arith.addf %45, %51 : vector<64x128xf32>
    %c0_35 = arith.constant 0 : index
    %c6 = arith.constant 6 : index
    %53 = memref.load %arg3[%c0_35, %c6] : memref<3x9xf32, #tpu.memory_space<smem>>
    %c0_36 = arith.constant 0 : index
    %c0_37 = arith.constant 0 : index
    %c0_38 = arith.constant 0 : index
    %c0_39 = arith.constant 0 : index
    %54 = vector.load %arg7[%c0_36, %c0_37, %c0_38, %c0_39] : memref<1x3x64x128xbf16, #tpu.memory_space<vmem>>, vector<1x1x64x128xbf16>
    %55 = vector.shape_cast %54 : vector<1x1x64x128xbf16> to vector<64x128xbf16>
    %56 = arith.extf %55 : vector<64x128xbf16> to vector<64x128xf32>
    %57 = vector.broadcast %53 : f32 to vector<64x128xf32>
    %58 = arith.mulf %57, %56 : vector<64x128xf32>
    %59 = arith.addf %52, %58 : vector<64x128xf32>
    %c0_40 = arith.constant 0 : index
    %c7 = arith.constant 7 : index
    %60 = memref.load %arg3[%c0_40, %c7] : memref<3x9xf32, #tpu.memory_space<smem>>
    %c0_41 = arith.constant 0 : index
    %c1_42 = arith.constant 1 : index
    %c0_43 = arith.constant 0 : index
    %c0_44 = arith.constant 0 : index
    %61 = vector.load %arg7[%c0_41, %c1_42, %c0_43, %c0_44] : memref<1x3x64x128xbf16, #tpu.memory_space<vmem>>, vector<1x1x64x128xbf16>
    %62 = vector.shape_cast %61 : vector<1x1x64x128xbf16> to vector<64x128xbf16>
    %63 = arith.extf %62 : vector<64x128xbf16> to vector<64x128xf32>
    %64 = vector.broadcast %60 : f32 to vector<64x128xf32>
    %65 = arith.mulf %64, %63 : vector<64x128xf32>
    %66 = arith.addf %59, %65 : vector<64x128xf32>
    %c0_45 = arith.constant 0 : index
    %c8 = arith.constant 8 : index
    %67 = memref.load %arg3[%c0_45, %c8] : memref<3x9xf32, #tpu.memory_space<smem>>
    %c0_46 = arith.constant 0 : index
    %c2_47 = arith.constant 2 : index
    %c0_48 = arith.constant 0 : index
    %c0_49 = arith.constant 0 : index
    %68 = vector.load %arg7[%c0_46, %c2_47, %c0_48, %c0_49] : memref<1x3x64x128xbf16, #tpu.memory_space<vmem>>, vector<1x1x64x128xbf16>
    %69 = vector.shape_cast %68 : vector<1x1x64x128xbf16> to vector<64x128xbf16>
    %70 = arith.extf %69 : vector<64x128xbf16> to vector<64x128xf32>
    %71 = vector.broadcast %67 : f32 to vector<64x128xf32>
    %72 = arith.mulf %71, %70 : vector<64x128xf32>
    %73 = arith.addf %66, %72 : vector<64x128xf32>
    %c0_50 = arith.constant 0 : index
    %74 = memref.load %arg4[%c0_50] : memref<3xf32, #tpu.memory_space<smem>>
    %75 = vector.broadcast %74 : f32 to vector<64x128xf32>
    %76 = arith.addf %73, %75 : vector<64x128xf32>
    %cst_51 = arith.constant 1.000000e-01 : f32
    %77 = vector.broadcast %cst_51 : f32 to vector<64x128xf32>
    %78 = arith.mulf %77, %76 : vector<64x128xf32>
    %79 = arith.maximumf %76, %78 : vector<64x128xf32>
    %80 = arith.addf %79, %11 : vector<64x128xf32>
    %c0_52 = arith.constant 0 : index
    %c0_53 = arith.constant 0 : index
    %c0_54 = arith.constant 0 : index
    %c0_55 = arith.constant 0 : index
    %81 = vector.load %arg11[%c0_52, %c0_53, %c0_54, %c0_55] : memref<1x3x64x128xf32, #tpu.memory_space<vmem>>, vector<1x1x64x128xf32>
    %82 = vector.shape_cast %81 : vector<1x1x64x128xf32> to vector<64x128xf32>
    %83 = vector.shape_cast %80 : vector<64x128xf32> to vector<1x1x64x128xf32>
    tpu.vector_store %arg11[%c0_52, %c0_53, %c0_54, %c0_55], %83 {strides = array<i32>} : memref<1x3x64x128xf32, #tpu.memory_space<vmem>>, vector<1x1x64x128xf32>,
    %c1_56 = arith.constant 1 : index
    %c0_57 = arith.constant 0 : index
    %c0_58 = arith.constant 0 : index
    %84 = vector.load %arg12[%c1_56, %c0_57, %c0_58] : memref<3x64x32xbf16, #tpu.memory_space<vmem>>, vector<1x64x32xbf16>
    %85 = vector.shape_cast %84 : vector<1x64x32xbf16> to vector<64x32xbf16>
    %cst_59 = arith.constant dense<0.000000e+00> : vector<64x128xf32>
    %86 = tpu.matmul %85, %8, %cst_59 {dimension_numbers = #tpu.dot_dimension_numbers<[1], [0], [0], [1], [0, 0, 1, 1], [], []>} : vector<64x32xbf16>, vector<32x128xbf16>, vector<64x128xf32> -> vector<64x128xf32>
    %c1_60 = arith.constant 1 : index
    %c0_61 = arith.constant 0 : index
    %87 = memref.load %arg3[%c1_60, %c0_61] : memref<3x9xf32, #tpu.memory_space<smem>>
    %c0_62 = arith.constant 0 : index
    %c0_63 = arith.constant 0 : index
    %c0_64 = arith.constant 0 : index
    %c0_65 = arith.constant 0 : index
    %88 = vector.load %arg5[%c0_62, %c0_63, %c0_64, %c0_65] : memref<1x3x64x128xbf16, #tpu.memory_space<vmem>>, vector<1x1x64x128xbf16>
    %89 = vector.shape_cast %88 : vector<1x1x64x128xbf16> to vector<64x128xbf16>
    %90 = arith.extf %89 : vector<64x128xbf16> to vector<64x128xf32>
    %91 = vector.broadcast %87 : f32 to vector<64x128xf32>
    %92 = arith.mulf %91, %90 : vector<64x128xf32>
    %c1_66 = arith.constant 1 : index
    %c1_67 = arith.constant 1 : index
    %93 = memref.load %arg3[%c1_66, %c1_67] : memref<3x9xf32, #tpu.memory_space<smem>>
    %c0_68 = arith.constant 0 : index
    %c1_69 = arith.constant 1 : index
    %c0_70 = arith.constant 0 : index
    %c0_71 = arith.constant 0 : index
    %94 = vector.load %arg5[%c0_68, %c1_69, %c0_70, %c0_71] : memref<1x3x64x128xbf16, #tpu.memory_space<vmem>>, vector<1x1x64x128xbf16>
    %95 = vector.shape_cast %94 : vector<1x1x64x128xbf16> to vector<64x128xbf16>
    %96 = arith.extf %95 : vector<64x128xbf16> to vector<64x128xf32>
    %97 = vector.broadcast %93 : f32 to vector<64x128xf32>
    %98 = arith.mulf %97, %96 : vector<64x128xf32>
    %99 = arith.addf %92, %98 : vector<64x128xf32>
    %c1_72 = arith.constant 1 : index
    %c2_73 = arith.constant 2 : index
    %100 = memref.load %arg3[%c1_72, %c2_73] : memref<3x9xf32, #tpu.memory_space<smem>>
    %c0_74 = arith.constant 0 : index
    %c2_75 = arith.constant 2 : index
    %c0_76 = arith.constant 0 : index
    %c0_77 = arith.constant 0 : index
    %101 = vector.load %arg5[%c0_74, %c2_75, %c0_76, %c0_77] : memref<1x3x64x128xbf16, #tpu.memory_space<vmem>>, vector<1x1x64x128xbf16>
    %102 = vector.shape_cast %101 : vector<1x1x64x128xbf16> to vector<64x128xbf16>
    %103 = arith.extf %102 : vector<64x128xbf16> to vector<64x128xf32>
    %104 = vector.broadcast %100 : f32 to vector<64x128xf32>
    %105 = arith.mulf %104, %103 : vector<64x128xf32>
    %106 = arith.addf %99, %105 : vector<64x128xf32>
    %c1_78 = arith.constant 1 : index
    %c3_79 = arith.constant 3 : index
    %107 = memref.load %arg3[%c1_78, %c3_79] : memref<3x9xf32, #tpu.memory_space<smem>>
    %c0_80 = arith.constant 0 : index
    %c0_81 = arith.constant 0 : index
    %c0_82 = arith.constant 0 : index
    %c0_83 = arith.constant 0 : index
    %108 = vector.load %arg6[%c0_80, %c0_81, %c0_82, %c0_83] : memref<1x3x64x128xbf16, #tpu.memory_space<vmem>>, vector<1x1x64x128xbf16>
    %109 = vector.shape_cast %108 : vector<1x1x64x128xbf16> to vector<64x128xbf16>
    %110 = arith.extf %109 : vector<64x128xbf16> to vector<64x128xf32>
    %111 = vector.broadcast %107 : f32 to vector<64x128xf32>
    %112 = arith.mulf %111, %110 : vector<64x128xf32>
    %113 = arith.addf %106, %112 : vector<64x128xf32>
    %c1_84 = arith.constant 1 : index
    %c4_85 = arith.constant 4 : index
    %114 = memref.load %arg3[%c1_84, %c4_85] : memref<3x9xf32, #tpu.memory_space<smem>>
    %c0_86 = arith.constant 0 : index
    %c1_87 = arith.constant 1 : index
    %c0_88 = arith.constant 0 : index
    %c0_89 = arith.constant 0 : index
    %115 = vector.load %arg6[%c0_86, %c1_87, %c0_88, %c0_89] : memref<1x3x64x128xbf16, #tpu.memory_space<vmem>>, vector<1x1x64x128xbf16>
    %116 = vector.shape_cast %115 : vector<1x1x64x128xbf16> to vector<64x128xbf16>
    %117 = arith.extf %116 : vector<64x128xbf16> to vector<64x128xf32>
    %118 = vector.broadcast %114 : f32 to vector<64x128xf32>
    %119 = arith.mulf %118, %117 : vector<64x128xf32>
    %120 = arith.addf %113, %119 : vector<64x128xf32>
    %c1_90 = arith.constant 1 : index
    %c5_91 = arith.constant 5 : index
    %121 = memref.load %arg3[%c1_90, %c5_91] : memref<3x9xf32, #tpu.memory_space<smem>>
    %c0_92 = arith.constant 0 : index
    %c2_93 = arith.constant 2 : index
    %c0_94 = arith.constant 0 : index
    %c0_95 = arith.constant 0 : index
    %122 = vector.load %arg6[%c0_92, %c2_93, %c0_94, %c0_95] : memref<1x3x64x128xbf16, #tpu.memory_space<vmem>>, vector<1x1x64x128xbf16>
    %123 = vector.shape_cast %122 : vector<1x1x64x128xbf16> to vector<64x128xbf16>
    %124 = arith.extf %123 : vector<64x128xbf16> to vector<64x128xf32>
    %125 = vector.broadcast %121 : f32 to vector<64x128xf32>
    %126 = arith.mulf %125, %124 : vector<64x128xf32>
    %127 = arith.addf %120, %126 : vector<64x128xf32>
    %c1_96 = arith.constant 1 : index
    %c6_97 = arith.constant 6 : index
    %128 = memref.load %arg3[%c1_96, %c6_97] : memref<3x9xf32, #tpu.memory_space<smem>>
    %c0_98 = arith.constant 0 : index
    %c0_99 = arith.constant 0 : index
    %c0_100 = arith.constant 0 : index
    %c0_101 = arith.constant 0 : index
    %129 = vector.load %arg7[%c0_98, %c0_99, %c0_100, %c0_101] : memref<1x3x64x128xbf16, #tpu.memory_space<vmem>>, vector<1x1x64x128xbf16>
    %130 = vector.shape_cast %129 : vector<1x1x64x128xbf16> to vector<64x128xbf16>
    %131 = arith.extf %130 : vector<64x128xbf16> to vector<64x128xf32>
    %132 = vector.broadcast %128 : f32 to vector<64x128xf32>
    %133 = arith.mulf %132, %131 : vector<64x128xf32>
    %134 = arith.addf %127, %133 : vector<64x128xf32>
    %c1_102 = arith.constant 1 : index
    %c7_103 = arith.constant 7 : index
    %135 = memref.load %arg3[%c1_102, %c7_103] : memref<3x9xf32, #tpu.memory_space<smem>>
    %c0_104 = arith.constant 0 : index
    %c1_105 = arith.constant 1 : index
    %c0_106 = arith.constant 0 : index
    %c0_107 = arith.constant 0 : index
    %136 = vector.load %arg7[%c0_104, %c1_105, %c0_106, %c0_107] : memref<1x3x64x128xbf16, #tpu.memory_space<vmem>>, vector<1x1x64x128xbf16>
    %137 = vector.shape_cast %136 : vector<1x1x64x128xbf16> to vector<64x128xbf16>
    %138 = arith.extf %137 : vector<64x128xbf16> to vector<64x128xf32>
    %139 = vector.broadcast %135 : f32 to vector<64x128xf32>
    %140 = arith.mulf %139, %138 : vector<64x128xf32>
    %141 = arith.addf %134, %140 : vector<64x128xf32>
    %c1_108 = arith.constant 1 : index
    %c8_109 = arith.constant 8 : index
    %142 = memref.load %arg3[%c1_108, %c8_109] : memref<3x9xf32, #tpu.memory_space<smem>>
    %c0_110 = arith.constant 0 : index
    %c2_111 = arith.constant 2 : index
    %c0_112 = arith.constant 0 : index
    %c0_113 = arith.constant 0 : index
    %143 = vector.load %arg7[%c0_110, %c2_111, %c0_112, %c0_113] : memref<1x3x64x128xbf16, #tpu.memory_space<vmem>>, vector<1x1x64x128xbf16>
    %144 = vector.shape_cast %143 : vector<1x1x64x128xbf16> to vector<64x128xbf16>
    %145 = arith.extf %144 : vector<64x128xbf16> to vector<64x128xf32>
    %146 = vector.broadcast %142 : f32 to vector<64x128xf32>
    %147 = arith.mulf %146, %145 : vector<64x128xf32>
    %148 = arith.addf %141, %147 : vector<64x128xf32>
    %c1_114 = arith.constant 1 : index
    %149 = memref.load %arg4[%c1_114] : memref<3xf32, #tpu.memory_space<smem>>
    %150 = vector.broadcast %149 : f32 to vector<64x128xf32>
    %151 = arith.addf %148, %150 : vector<64x128xf32>
    %cst_115 = arith.constant 1.000000e-01 : f32
    %152 = vector.broadcast %cst_115 : f32 to vector<64x128xf32>
    %153 = arith.mulf %152, %151 : vector<64x128xf32>
    %154 = arith.maximumf %151, %153 : vector<64x128xf32>
    %155 = arith.addf %154, %86 : vector<64x128xf32>
    %c0_116 = arith.constant 0 : index
    %c1_117 = arith.constant 1 : index
    %c0_118 = arith.constant 0 : index
    %c0_119 = arith.constant 0 : index
    %156 = vector.load %arg11[%c0_116, %c1_117, %c0_118, %c0_119] : memref<1x3x64x128xf32, #tpu.memory_space<vmem>>, vector<1x1x64x128xf32>
    %157 = vector.shape_cast %156 : vector<1x1x64x128xf32> to vector<64x128xf32>
    %158 = vector.shape_cast %155 : vector<64x128xf32> to vector<1x1x64x128xf32>
    tpu.vector_store %arg11[%c0_116, %c1_117, %c0_118, %c0_119], %158 {strides = array<i32>} : memref<1x3x64x128xf32, #tpu.memory_space<vmem>>, vector<1x1x64x128xf32>,
    %c2_120 = arith.constant 2 : index
    %c0_121 = arith.constant 0 : index
    %c0_122 = arith.constant 0 : index
    %159 = vector.load %arg12[%c2_120, %c0_121, %c0_122] : memref<3x64x32xbf16, #tpu.memory_space<vmem>>, vector<1x64x32xbf16>
    %160 = vector.shape_cast %159 : vector<1x64x32xbf16> to vector<64x32xbf16>
    %cst_123 = arith.constant dense<0.000000e+00> : vector<64x128xf32>
    %161 = tpu.matmul %160, %8, %cst_123 {dimension_numbers = #tpu.dot_dimension_numbers<[1], [0], [0], [1], [0, 0, 1, 1], [], []>} : vector<64x32xbf16>, vector<32x128xbf16>, vector<64x128xf32> -> vector<64x128xf32>
    %c2_124 = arith.constant 2 : index
    %c0_125 = arith.constant 0 : index
    %162 = memref.load %arg3[%c2_124, %c0_125] : memref<3x9xf32, #tpu.memory_space<smem>>
    %c0_126 = arith.constant 0 : index
    %c0_127 = arith.constant 0 : index
    %c0_128 = arith.constant 0 : index
    %c0_129 = arith.constant 0 : index
    %163 = vector.load %arg5[%c0_126, %c0_127, %c0_128, %c0_129] : memref<1x3x64x128xbf16, #tpu.memory_space<vmem>>, vector<1x1x64x128xbf16>
    %164 = vector.shape_cast %163 : vector<1x1x64x128xbf16> to vector<64x128xbf16>
    %165 = arith.extf %164 : vector<64x128xbf16> to vector<64x128xf32>
    %166 = vector.broadcast %162 : f32 to vector<64x128xf32>
    %167 = arith.mulf %166, %165 : vector<64x128xf32>
    %c2_130 = arith.constant 2 : index
    %c1_131 = arith.constant 1 : index
    %168 = memref.load %arg3[%c2_130, %c1_131] : memref<3x9xf32, #tpu.memory_space<smem>>
    %c0_132 = arith.constant 0 : index
    %c1_133 = arith.constant 1 : index
    %c0_134 = arith.constant 0 : index
    %c0_135 = arith.constant 0 : index
    %169 = vector.load %arg5[%c0_132, %c1_133, %c0_134, %c0_135] : memref<1x3x64x128xbf16, #tpu.memory_space<vmem>>, vector<1x1x64x128xbf16>
    %170 = vector.shape_cast %169 : vector<1x1x64x128xbf16> to vector<64x128xbf16>
    %171 = arith.extf %170 : vector<64x128xbf16> to vector<64x128xf32>
    %172 = vector.broadcast %168 : f32 to vector<64x128xf32>
    %173 = arith.mulf %172, %171 : vector<64x128xf32>
    %174 = arith.addf %167, %173 : vector<64x128xf32>
    %c2_136 = arith.constant 2 : index
    %c2_137 = arith.constant 2 : index
    %175 = memref.load %arg3[%c2_136, %c2_137] : memref<3x9xf32, #tpu.memory_space<smem>>
    %c0_138 = arith.constant 0 : index
    %c2_139 = arith.constant 2 : index
    %c0_140 = arith.constant 0 : index
    %c0_141 = arith.constant 0 : index
    %176 = vector.load %arg5[%c0_138, %c2_139, %c0_140, %c0_141] : memref<1x3x64x128xbf16, #tpu.memory_space<vmem>>, vector<1x1x64x128xbf16>
    %177 = vector.shape_cast %176 : vector<1x1x64x128xbf16> to vector<64x128xbf16>
    %178 = arith.extf %177 : vector<64x128xbf16> to vector<64x128xf32>
    %179 = vector.broadcast %175 : f32 to vector<64x128xf32>
    %180 = arith.mulf %179, %178 : vector<64x128xf32>
    %181 = arith.addf %174, %180 : vector<64x128xf32>
    %c2_142 = arith.constant 2 : index
    %c3_143 = arith.constant 3 : index
    %182 = memref.load %arg3[%c2_142, %c3_143] : memref<3x9xf32, #tpu.memory_space<smem>>
    %c0_144 = arith.constant 0 : index
    %c0_145 = arith.constant 0 : index
    %c0_146 = arith.constant 0 : index
    %c0_147 = arith.constant 0 : index
    %183 = vector.load %arg6[%c0_144, %c0_145, %c0_146, %c0_147] : memref<1x3x64x128xbf16, #tpu.memory_space<vmem>>, vector<1x1x64x128xbf16>
    %184 = vector.shape_cast %183 : vector<1x1x64x128xbf16> to vector<64x128xbf16>
    %185 = arith.extf %184 : vector<64x128xbf16> to vector<64x128xf32>
    %186 = vector.broadcast %182 : f32 to vector<64x128xf32>
    %187 = arith.mulf %186, %185 : vector<64x128xf32>
    %188 = arith.addf %181, %187 : vector<64x128xf32>
    %c2_148 = arith.constant 2 : index
    %c4_149 = arith.constant 4 : index
    %189 = memref.load %arg3[%c2_148, %c4_149] : memref<3x9xf32, #tpu.memory_space<smem>>
    %c0_150 = arith.constant 0 : index
    %c1_151 = arith.constant 1 : index
    %c0_152 = arith.constant 0 : index
    %c0_153 = arith.constant 0 : index
    %190 = vector.load %arg6[%c0_150, %c1_151, %c0_152, %c0_153] : memref<1x3x64x128xbf16, #tpu.memory_space<vmem>>, vector<1x1x64x128xbf16>
    %191 = vector.shape_cast %190 : vector<1x1x64x128xbf16> to vector<64x128xbf16>
    %192 = arith.extf %191 : vector<64x128xbf16> to vector<64x128xf32>
    %193 = vector.broadcast %189 : f32 to vector<64x128xf32>
    %194 = arith.mulf %193, %192 : vector<64x128xf32>
    %195 = arith.addf %188, %194 : vector<64x128xf32>
    %c2_154 = arith.constant 2 : index
    %c5_155 = arith.constant 5 : index
    %196 = memref.load %arg3[%c2_154, %c5_155] : memref<3x9xf32, #tpu.memory_space<smem>>
    %c0_156 = arith.constant 0 : index
    %c2_157 = arith.constant 2 : index
    %c0_158 = arith.constant 0 : index
    %c0_159 = arith.constant 0 : index
    %197 = vector.load %arg6[%c0_156, %c2_157, %c0_158, %c0_159] : memref<1x3x64x128xbf16, #tpu.memory_space<vmem>>, vector<1x1x64x128xbf16>
    %198 = vector.shape_cast %197 : vector<1x1x64x128xbf16> to vector<64x128xbf16>
    %199 = arith.extf %198 : vector<64x128xbf16> to vector<64x128xf32>
    %200 = vector.broadcast %196 : f32 to vector<64x128xf32>
    %201 = arith.mulf %200, %199 : vector<64x128xf32>
    %202 = arith.addf %195, %201 : vector<64x128xf32>
    %c2_160 = arith.constant 2 : index
    %c6_161 = arith.constant 6 : index
    %203 = memref.load %arg3[%c2_160, %c6_161] : memref<3x9xf32, #tpu.memory_space<smem>>
    %c0_162 = arith.constant 0 : index
    %c0_163 = arith.constant 0 : index
    %c0_164 = arith.constant 0 : index
    %c0_165 = arith.constant 0 : index
    %204 = vector.load %arg7[%c0_162, %c0_163, %c0_164, %c0_165] : memref<1x3x64x128xbf16, #tpu.memory_space<vmem>>, vector<1x1x64x128xbf16>
    %205 = vector.shape_cast %204 : vector<1x1x64x128xbf16> to vector<64x128xbf16>
    %206 = arith.extf %205 : vector<64x128xbf16> to vector<64x128xf32>
    %207 = vector.broadcast %203 : f32 to vector<64x128xf32>
    %208 = arith.mulf %207, %206 : vector<64x128xf32>
    %209 = arith.addf %202, %208 : vector<64x128xf32>
    %c2_166 = arith.constant 2 : index
    %c7_167 = arith.constant 7 : index
    %210 = memref.load %arg3[%c2_166, %c7_167] : memref<3x9xf32, #tpu.memory_space<smem>>
    %c0_168 = arith.constant 0 : index
    %c1_169 = arith.constant 1 : index
    %c0_170 = arith.constant 0 : index
    %c0_171 = arith.constant 0 : index
    %211 = vector.load %arg7[%c0_168, %c1_169, %c0_170, %c0_171] : memref<1x3x64x128xbf16, #tpu.memory_space<vmem>>, vector<1x1x64x128xbf16>
    %212 = vector.shape_cast %211 : vector<1x1x64x128xbf16> to vector<64x128xbf16>
    %213 = arith.extf %212 : vector<64x128xbf16> to vector<64x128xf32>
    %214 = vector.broadcast %210 : f32 to vector<64x128xf32>
    %215 = arith.mulf %214, %213 : vector<64x128xf32>
    %216 = arith.addf %209, %215 : vector<64x128xf32>
    %c2_172 = arith.constant 2 : index
    %c8_173 = arith.constant 8 : index
    %217 = memref.load %arg3[%c2_172, %c8_173] : memref<3x9xf32, #tpu.memory_space<smem>>
    %c0_174 = arith.constant 0 : index
    %c2_175 = arith.constant 2 : index
    %c0_176 = arith.constant 0 : index
    %c0_177 = arith.constant 0 : index
    %218 = vector.load %arg7[%c0_174, %c2_175, %c0_176, %c0_177] : memref<1x3x64x128xbf16, #tpu.memory_space<vmem>>, vector<1x1x64x128xbf16>
    %219 = vector.shape_cast %218 : vector<1x1x64x128xbf16> to vector<64x128xbf16>
    %220 = arith.extf %219 : vector<64x128xbf16> to vector<64x128xf32>
    %221 = vector.broadcast %217 : f32 to vector<64x128xf32>
    %222 = arith.mulf %221, %220 : vector<64x128xf32>
    %223 = arith.addf %216, %222 : vector<64x128xf32>
    %c2_178 = arith.constant 2 : index
    %224 = memref.load %arg4[%c2_178] : memref<3xf32, #tpu.memory_space<smem>>
    %225 = vector.broadcast %224 : f32 to vector<64x128xf32>
    %226 = arith.addf %223, %225 : vector<64x128xf32>
    %cst_179 = arith.constant 1.000000e-01 : f32
    %227 = vector.broadcast %cst_179 : f32 to vector<64x128xf32>
    %228 = arith.mulf %227, %226 : vector<64x128xf32>
    %229 = arith.maximumf %226, %228 : vector<64x128xf32>
    %230 = arith.addf %229, %161 : vector<64x128xf32>
    %c0_180 = arith.constant 0 : index
    %c2_181 = arith.constant 2 : index
    %c0_182 = arith.constant 0 : index
    %c0_183 = arith.constant 0 : index
    %231 = vector.load %arg11[%c0_180, %c2_181, %c0_182, %c0_183] : memref<1x3x64x128xf32, #tpu.memory_space<vmem>>, vector<1x1x64x128xf32>
    %232 = vector.shape_cast %231 : vector<1x1x64x128xf32> to vector<64x128xf32>
    %233 = vector.shape_cast %230 : vector<64x128xf32> to vector<1x1x64x128xf32>
    tpu.vector_store %arg11[%c0_180, %c2_181, %c0_182, %c0_183], %233 {strides = array<i32>} : memref<1x3x64x128xf32, #tpu.memory_space<vmem>>, vector<1x1x64x128xf32>,
    return
  }
  func.func @transform_0(%arg0: i32, %arg1: i32, %arg2: i32) -> (i32, i32) {
    %c0_i32 = arith.constant 0 : i32
    %c0_i32_0 = arith.constant 0 : i32
    %c0_i32_1 = arith.constant 0 : i32
    return %c0_i32, %c0_i32_0 : i32, i32
  }
  func.func @transform_1(%arg0: i32, %arg1: i32, %arg2: i32) -> i32 {
    %c0_i32 = arith.constant 0 : i32
    %c0_i32_0 = arith.constant 0 : i32
    return %c0_i32 : i32
  }
  func.func @transform_2(%arg0: i32, %arg1: i32, %arg2: i32) -> (i32, i32, i32, i32) {
    %c0_i32 = arith.constant 0 : i32
    %c0_i32_0 = arith.constant 0 : i32
    return %arg0, %c0_i32, %arg1, %arg2 : i32, i32, i32, i32
  }
  func.func @transform_3(%arg0: i32, %arg1: i32, %arg2: i32) -> (i32, i32, i32, i32) {
    %c0_i32 = arith.constant 0 : i32
    %c0_i32_0 = arith.constant 0 : i32
    return %arg0, %c0_i32, %arg1, %arg2 : i32, i32, i32, i32
  }
  func.func @transform_4(%arg0: i32, %arg1: i32, %arg2: i32) -> (i32, i32, i32, i32) {
    %c0_i32 = arith.constant 0 : i32
    %c0_i32_0 = arith.constant 0 : i32
    return %arg0, %c0_i32, %arg1, %arg2 : i32, i32, i32, i32
  }
  func.func @transform_5(%arg0: i32, %arg1: i32, %arg2: i32) -> (i32, i32, i32, i32) {
    %c0_i32 = arith.constant 0 : i32
    %c0_i32_0 = arith.constant 0 : i32
    %c0_i32_1 = arith.constant 0 : i32
    %c0_i32_2 = arith.constant 0 : i32
    return %arg0, %c0_i32, %c0_i32_0, %c0_i32_1 : i32, i32, i32, i32
  }
  func.func @transform_6(%arg0: i32, %arg1: i32, %arg2: i32) -> (i32, i32) {
    %c0_i32 = arith.constant 0 : i32
    %c0_i32_0 = arith.constant 0 : i32
    %c0_i32_1 = arith.constant 0 : i32
    return %c0_i32, %c0_i32_0 : i32, i32
  }
  func.func @transform_7(%arg0: i32, %arg1: i32, %arg2: i32) -> (i32, i32) {
    %c0_i32 = arith.constant 0 : i32
    %c0_i32_0 = arith.constant 0 : i32
    %c0_i32_1 = arith.constant 0 : i32
    return %c0_i32, %c0_i32_0 : i32, i32
  }
  func.func @transform_8(%arg0: i32, %arg1: i32, %arg2: i32) -> (i32, i32, i32, i32) {
    %c0_i32 = arith.constant 0 : i32
    %c0_i32_0 = arith.constant 0 : i32
    return %arg0, %c0_i32, %arg1, %arg2 : i32, i32, i32, i32
  }
}

</mosaic_0001>

<llo_original>
// kernel: tpu_custom_call.1
$region0: #{tpu_custom_call.1}
  #allocation0 [shape = 'u32[]', space=smem, size = 0x4, offset = 0x4, fixed_abs, tag = 'smem constant byte address 0x4 - core index']
  #allocation1 [shape = 'u32[72,128]{1,0:T(1,128)}', space=vmem, size = 0x9000, scoped, tag = 'internal scratch']
  #allocation2 [shape = 'bf16[3,64,32]{2,1,0:T(8,128)(2,1)}', space=vmem, size = 0xc000, scoped, tag = 'scratch operand']
  %s0 = inlined_call_operand.vmem [shape: f32[3,9], index: 0, kind: input, shape index: {}]
  %s1 = inlined_call_operand.vmem [shape: f32[3], index: 1, kind: input, shape index: {}]
  %s2 = inlined_call_operand.hbm [shape: bf16[2,3,64,128], index: 2, kind: input, shape index: {}]
  %s3 = inlined_call_operand.hbm [shape: bf16[2,3,64,128], index: 3, kind: input, shape index: {}]
  %s4 = inlined_call_operand.hbm [shape: bf16[2,3,64,128], index: 4, kind: input, shape index: {}]
  %s5 = inlined_call_operand.hbm [shape: bf16[2,3,16,32], index: 5, kind: input, shape index: {}]
  %s6 = inlined_call_operand.vmem [shape: bf16[64,16], index: 6, kind: input, shape index: {}]
  %s7 = inlined_call_operand.vmem [shape: bf16[32,128], index: 7, kind: input, shape index: {}]
  %s8 = inlined_call_operand.hbm [shape: f32[2,3,64,128], index: 8, kind: output, shape index: {}]
  %s9 = sld [smem:[#allocation0]]
  $region93: #{tpu_custom_call.1} parent=0
    _
  %s11 = ssub.s32 1, %s9
  %s12 = scalar_select 0, %s11, %s9
  $region1: #{tpu_custom_call.1} parent=0
    #allocation3 [shape = 'u8[2048]{0}', space=smem, size = 0x800, scoped, tag = 'input window, operand 0, single buffered']
    #allocation4 [shape = 's32[2]{0}', space=sflag, size = 0x8, scoped, tag = 'scoped memory for tpu_custom_call.1']
    #allocation5 [shape = 's32[2]{0}', space=sflag, size = 0x8, scoped, tag = 'scoped memory for tpu_custom_call.1']
    #allocation6 [shape = 's32[2]{0}', space=sflag, size = 0x8, scoped, tag = 'scoped memory for tpu_custom_call.1']
    #allocation7 [shape = 'u8[512]{0}', space=smem, size = 0x200, scoped, tag = 'input window, operand 1, single buffered']
    #allocation8 [shape = 's32[1]{0}', space=sflag, size = 0x4, scoped, tag = 'scoped memory for tpu_custom_call.1']
    #allocation9 [shape = 'u8[98304]{0}', space=vmem, size = 0x18000, scoped, tag = 'input window, operand 2']
    #allocation10 [shape = 'u8[98304]{0}', space=vmem, size = 0x18000, scoped, tag = 'input window, operand 3']
    #allocation11 [shape = 's32[2]{0}', space=sflag, size = 0x8, scoped, tag = 'scoped memory for tpu_custom_call.1']
    #allocation12 [shape = 'u8[98304]{0}', space=vmem, size = 0x18000, scoped, tag = 'input window, operand 4']
    #allocation13 [shape = 'u8[24576]{0}', space=vmem, size = 0x6000, scoped, tag = 'input window, operand 5']
    #allocation14 [shape = 's32[2]{0}', space=sflag, size = 0x8, scoped, tag = 'scoped memory for tpu_custom_call.1']
    #allocation15 [shape = 'u8[196608]{0}', space=vmem, size = 0x30000, scoped, tag = 'output window, operand 0']
    %13 = vsyncpa [#allocation6], 0
    %14 = vsyncpa [#allocation8], 0
    %15 = vsyncpa [#allocation4], 0
    %s16 = scalar_lea.sflag [#allocation4], 1
    %17 = vsyncpa %s16, 0
    %18 = vsyncpa [#allocation11], 0
    %s19 = scalar_lea.sflag [#allocation11], 1
    %20 = vsyncpa %s19, 0
    %21 = vsyncpa [#allocation14], 0
    %s22 = scalar_lea.sflag [#allocation14], 1
    %23 = vsyncpa %s22, 0
    %24 = vsyncpa [#allocation5], 0
    %s25 = scalar_lea.sflag [#allocation5], 1
    %26 = vsyncpa %s25, 0
    loop: start=0, step=1, limit=4
    $region2: #{tpu_custom_call.1} parent=1 // loop_pre_header
      _
    $region3: #{tpu_custom_call.1} parent=1 // loop_header
      %s28 = sphi 0, %s32
      %p29 = scmp.ge.s32.totalorder %s28, 4
      %s35 = sphi 0, %s54
      %s36 = sphi 0, %s50
      %s37 = sphi 0, %s46
      %s38 = sphi 0, %s35
      %s39 = sphi 0, %s36
      %s40 = sphi 0, %s37
      %s41 = sphi 0, %s38
      %s42 = sphi 0, %s39
      %s43 = sphi 0, %s40
      %s55 = sphi 0, %s55
      %s57 = sphi 0, %s55
      %s58 = sphi 0, %s57
      %s72 = sphi 0, %s58
      %s76 = sphi 0, %s76
      %s78 = sphi 0, %s76
      %s79 = sphi 0, %s78
      %s93 = sphi 0, %s79
      %s103 = sphi 0, %s105
      %s106 = sphi 0, %s103
      %s107 = sphi 0, %s106
      %s123 = sphi 0, %s107
      %s133 = sphi 0, %s135
      %s136 = sphi 0, %s133
      %s137 = sphi 0, %s136
      %s153 = sphi 0, %s137
      %s163 = sphi 0, %s165
      %s166 = sphi 0, %s163
      %s167 = sphi 0, %s166
      %s183 = sphi 0, %s167
      %s189 = sphi 0, %s191
      %s192 = sphi 0, %s189
      %s193 = sphi 0, %s192
      %s209 = sphi 0, %s193
      %s213 = sphi 0, %s213
      %s215 = sphi 0, %s213
      %s216 = sphi 0, %s215
      %s230 = sphi 0, %s216
      %s234 = sphi 0, %s234
      %s236 = sphi 0, %s234
      %s237 = sphi 0, %s236
      %s251 = sphi 0, %s237
      %s261 = sphi 0, %s263
      %s264 = sphi 0, %s261
      %s265 = sphi 0, %s264
      %s281 = sphi 0, %s265
    $region4: #{tpu_custom_call.1} parent=1 // loop_header_branch
      %31 = sbr.rel (%p29) target = $region8
    $region5: #{tpu_custom_call.1} parent=1 // loop_body
      %s33 = ssub.s32 %s28, 1
      %s34 = ssub.s32 %s28, 2
      %s44 = sadd.s32 1, %s37
      %p45 = scmp.ge.s32.totalorder %s44, 1
      %s46 = scalar_select %p45, 0, %s44
      %s47 = sadd.s32 1, %s36
      %s48 = scalar_select %p45, %s47, %s36
      %p49 = scmp.ge.s32.totalorder %s48, 1
      %s50 = scalar_select %p49, 0, %s48
      %s51 = sadd.s32 1, %s35
      %s52 = scalar_select %p49, %s51, %s35
      %p53 = scmp.ge.s32.totalorder %s52, 2
      %s54 = scalar_select %p53, 0, %s52
      %s56 = sadd.s32 %s55, 1
      %p59 = scmp.eq.s32.totalorder %s28, 1
      %p60 = scmp.ne.s32.totalorder %s55, %s57
      %p61 = scmp.eq.s32.totalorder %s28, 0
      %p62 = por %p60, %p61
      %p63 = scmp.ne.s32.totalorder %s55, %s57
      %p64 = scmp.eq.s32.totalorder %s33, 1
      %p65 = por %p63, %p64
      %p66 = scmp.ne.s32.totalorder %s57, %s58
      %p67 = scmp.eq.s32.totalorder %s33, 0
      %p68 = por %p66, %p67
      %p69 = scmp.ne.s32.totalorder %s57, %s58
      %p70 = scmp.eq.s32.totalorder %s34, 1
      %p71 = por %p69, %p70
      %p73 = scmp.ne.s32.totalorder %s58, %s72
      %p74 = scmp.eq.s32.totalorder %s34, 0
      %p75 = por %p73, %p74
      %s77 = sadd.s32 %s76, 1
      %p80 = scmp.eq.s32.totalorder %s28, 1
      %p81 = scmp.ne.s32.totalorder %s76, %s78
      %p82 = scmp.eq.s32.totalorder %s28, 0
      %p83 = por %p81, %p82
      %p84 = scmp.ne.s32.totalorder %s76, %s78
      %p85 = scmp.eq.s32.totalorder %s33, 1
      %p86 = por %p84, %p85
      %p87 = scmp.ne.s32.totalorder %s78, %s79
      %p88 = scmp.eq.s32.totalorder %s33, 0
      %p89 = por %p87, %p88
      %p90 = scmp.ne.s32.totalorder %s78, %s79
      %p91 = scmp.eq.s32.totalorder %s34, 1
      %p92 = por %p90, %p91
      %p94 = scmp.ne.s32.totalorder %s79, %s93
      %p95 = scmp.eq.s32.totalorder %s34, 0
      %p96 = por %p94, %p95
      %s97 = ssub.s32 %s35, %s54
      %s98 = ssub.s32 %s36, %s50
      %s99 = sor.u32 %s97, %s98
      %s100 = ssub.s32 %s37, %s46
      %s101 = sor.u32 %s99, %s100
      %p102 = scmp.eq.s32.totalorder %s101, 0
      %s104 = sadd.s32 %s103, 1
      %s105 = scalar_select %p102, %s103, %s104
      %p108 = pneg %p102
      %p109 = scmp.eq.s32.totalorder %s28, 1
      %p110 = por %p108, %p109
      %p111 = scmp.ne.s32.totalorder %s103, %s106
      %p112 = scmp.eq.s32.totalorder %s28, 0
      %p113 = por %p111, %p112
      %p114 = scmp.ne.s32.totalorder %s103, %s106
      %p115 = scmp.eq.s32.totalorder %s33, 1
      %p116 = por %p114, %p115
      %p117 = scmp.ne.s32.totalorder %s106, %s107
      %p118 = scmp.eq.s32.totalorder %s33, 0
      %p119 = por %p117, %p118
      %p120 = scmp.ne.s32.totalorder %s106, %s107
      %p121 = scmp.eq.s32.totalorder %s34, 1
      %p122 = por %p120, %p121
      %p124 = scmp.ne.s32.totalorder %s107, %s123
      %p125 = scmp.eq.s32.totalorder %s34, 0
      %p126 = por %p124, %p125
      %s127 = ssub.s32 %s35, %s54
      %s128 = ssub.s32 %s36, %s50
      %s129 = sor.u32 %s127, %s128
      %s130 = ssub.s32 %s37, %s46
      %s131 = sor.u32 %s129, %s130
      %p132 = scmp.eq.s32.totalorder %s131, 0
      %s134 = sadd.s32 %s133, 1
      %s135 = scalar_select %p132, %s133, %s134
      %p138 = pneg %p132
      %p139 = scmp.eq.s32.totalorder %s28, 1
      %p140 = por %p138, %p139
      %p141 = scmp.ne.s32.totalorder %s133, %s136
      %p142 = scmp.eq.s32.totalorder %s28, 0
      %p143 = por %p141, %p142
      %p144 = scmp.ne.s32.totalorder %s133, %s136
      %p145 = scmp.eq.s32.totalorder %s33, 1
      %p146 = por %p144, %p145
      %p147 = scmp.ne.s32.totalorder %s136, %s137
      %p148 = scmp.eq.s32.totalorder %s33, 0
      %p149 = por %p147, %p148
      %p150 = scmp.ne.s32.totalorder %s136, %s137
      %p151 = scmp.eq.s32.totalorder %s34, 1
      %p152 = por %p150, %p151
      %p154 = scmp.ne.s32.totalorder %s137, %s153
      %p155 = scmp.eq.s32.totalorder %s34, 0
      %p156 = por %p154, %p155
      %s157 = ssub.s32 %s35, %s54
      %s158 = ssub.s32 %s36, %s50
      %s159 = sor.u32 %s157, %s158
      %s160 = ssub.s32 %s37, %s46
      %s161 = sor.u32 %s159, %s160
      %p162 = scmp.eq.s32.totalorder %s161, 0
      %s164 = sadd.s32 %s163, 1
      %s165 = scalar_select %p162, %s163, %s164
      %p168 = pneg %p162
      %p169 = scmp.eq.s32.totalorder %s28, 1
      %p170 = por %p168, %p169
      %p171 = scmp.ne.s32.totalorder %s163, %s166
      %p172 = scmp.eq.s32.totalorder %s28, 0
      %p173 = por %p171, %p172
      %p174 = scmp.ne.s32.totalorder %s163, %s166
      %p175 = scmp.eq.s32.totalorder %s33, 1
      %p176 = por %p174, %p175
      %p177 = scmp.ne.s32.totalorder %s166, %s167
      %p178 = scmp.eq.s32.totalorder %s33, 0
      %p179 = por %p177, %p178
      %p180 = scmp.ne.s32.totalorder %s166, %s167
      %p181 = scmp.eq.s32.totalorder %s34, 1
      %p182 = por %p180, %p181
      %p184 = scmp.ne.s32.totalorder %s167, %s183
      %p185 = scmp.eq.s32.totalorder %s34, 0
      %p186 = por %p184, %p185
      %s187 = ssub.s32 %s35, %s54
      %p188 = scmp.eq.s32.totalorder %s187, 0
      %s190 = sadd.s32 %s189, 1
      %s191 = scalar_select %p188, %s189, %s190
      %p194 = pneg %p188
      %p195 = scmp.eq.s32.totalorder %s28, 1
      %p196 = por %p194, %p195
      %p197 = scmp.ne.s32.totalorder %s189, %s192
      %p198 = scmp.eq.s32.totalorder %s28, 0
      %p199 = por %p197, %p198
      %p200 = scmp.ne.s32.totalorder %s189, %s192
      %p201 = scmp.eq.s32.totalorder %s33, 1
      %p202 = por %p200, %p201
      %p203 = scmp.ne.s32.totalorder %s192, %s193
      %p204 = scmp.eq.s32.totalorder %s33, 0
      %p205 = por %p203, %p204
      %p206 = scmp.ne.s32.totalorder %s192, %s193
      %p207 = scmp.eq.s32.totalorder %s34, 1
      %p208 = por %p206, %p207
      %p210 = scmp.ne.s32.totalorder %s193, %s209
      %p211 = scmp.eq.s32.totalorder %s34, 0
      %p212 = por %p210, %p211
      %s214 = sadd.s32 %s213, 1
      %p217 = scmp.eq.s32.totalorder %s28, 1
      %p218 = scmp.ne.s32.totalorder %s213, %s215
      %p219 = scmp.eq.s32.totalorder %s28, 0
      %p220 = por %p218, %p219
      %p221 = scmp.ne.s32.totalorder %s213, %s215
      %p222 = scmp.eq.s32.totalorder %s33, 1
      %p223 = por %p221, %p222
      %p224 = scmp.ne.s32.totalorder %s215, %s216
      %p225 = scmp.eq.s32.totalorder %s33, 0
      %p226 = por %p224, %p225
      %p227 = scmp.ne.s32.totalorder %s215, %s216
      %p228 = scmp.eq.s32.totalorder %s34, 1
      %p229 = por %p227, %p228
      %p231 = scmp.ne.s32.totalorder %s216, %s230
      %p232 = scmp.eq.s32.totalorder %s34, 0
      %p233 = por %p231, %p232
      %s235 = sadd.s32 %s234, 1
      %p238 = scmp.eq.s32.totalorder %s28, 1
      %p239 = scmp.ne.s32.totalorder %s234, %s236
      %p240 = scmp.eq.s32.totalorder %s28, 0
      %p241 = por %p239, %p240
      %p242 = scmp.ne.s32.totalorder %s234, %s236
      %p243 = scmp.eq.s32.totalorder %s33, 1
      %p244 = por %p242, %p243
      %p245 = scmp.ne.s32.totalorder %s236, %s237
      %p246 = scmp.eq.s32.totalorder %s33, 0
      %p247 = por %p245, %p246
      %p248 = scmp.ne.s32.totalorder %s236, %s237
      %p249 = scmp.eq.s32.totalorder %s34, 1
      %p250 = por %p248, %p249
      %p252 = scmp.ne.s32.totalorder %s237, %s251
      %p253 = scmp.eq.s32.totalorder %s34, 0
      %p254 = por %p252, %p253
      %s255 = ssub.s32 %s35, %s54
      %s256 = ssub.s32 %s36, %s50
      %s257 = sor.u32 %s255, %s256
      %s258 = ssub.s32 %s37, %s46
      %s259 = sor.u32 %s257, %s258
      %p260 = scmp.eq.s32.totalorder %s259, 0
      %s262 = sadd.s32 %s261, 1
      %s263 = scalar_select %p260, %s261, %s262
      %p266 = pneg %p260
      %p267 = scmp.eq.s32.totalorder %s28, 1
      %p268 = por %p266, %p267
      %p269 = scmp.ne.s32.totalorder %s261, %s264
      %p270 = scmp.eq.s32.totalorder %s28, 0
      %p271 = por %p269, %p270
      %p272 = scmp.ne.s32.totalorder %s261, %s264
      %p273 = scmp.eq.s32.totalorder %s33, 1
      %p274 = por %p272, %p273
      %p275 = scmp.ne.s32.totalorder %s264, %s265
      %p276 = scmp.eq.s32.totalorder %s33, 0
      %p277 = por %p275, %p276
      %p278 = scmp.ne.s32.totalorder %s264, %s265
      %p279 = scmp.eq.s32.totalorder %s34, 1
      %p280 = por %p278, %p279
      %p282 = scmp.ne.s32.totalorder %s265, %s281
      %p283 = scmp.eq.s32.totalorder %s34, 0
      %p284 = por %p282, %p283
      %p285 = scmp.le.s32.totalorder 1, %s28
      %p286 = scmp.lt.s32.totalorder %s28, 3
      %p287 = pnand %p285, %p286
      %p288 = pneg %p287
      // Predicated region
      $region9: #{tpu_custom_call.1} parent=5 // pred_check
        _
      $region10: #{tpu_custom_call.1} parent=5 // pred_check_branch
        %290 = sbr.rel (%p287) target = $region12
      $region11: #{tpu_custom_call.1} parent=5 // pred_region
        %s291 = ssub.s32 %s28, 1
        // Predicated region
        $region13: #{tpu_custom_call.1} parent=11 // pred_check
          %p292 = pneg %p68
        $region14: #{tpu_custom_call.1} parent=11 // pred_check_branch
          %294 = sbr.rel (%p292) target = $region16
        $region15: #{tpu_custom_call.1} parent=11 // pred_region
          %296 = vsyncadd [#allocation6], 0
          %s298 = sshll.u32 %s0, 4
          %s299 = int_to_ptr.vmem [resolvable:$true] %s298
          %301 = dma.vmem_to_smem %s299, 64, [#allocation3], [#allocation6]
        $region16: #{tpu_custom_call.1} parent=11 // pred_fallthru
          _
        // Predicated region
        $region17: #{tpu_custom_call.1} parent=11 // pred_check
          %p302 = pneg %p89
        $region18: #{tpu_custom_call.1} parent=11 // pred_check_branch
          %304 = sbr.rel (%p302) target = $region20
        $region19: #{tpu_custom_call.1} parent=11 // pred_region
          %306 = vsyncadd [#allocation8], 0
          %s308 = sshll.u32 %s1, 4
          %s309 = int_to_ptr.vmem [resolvable:$true] %s308
          %311 = dma.vmem_to_smem %s309, 16, [#allocation7], [#allocation8]
        $region20: #{tpu_custom_call.1} parent=11 // pred_fallthru
          _
        // Predicated region
        $region21: #{tpu_custom_call.1} parent=11 // pred_check
          %p312 = pneg %p226
        $region22: #{tpu_custom_call.1} parent=11 // pred_check_branch
          %314 = sbr.rel (%p312) target = $region24
        $region23: #{tpu_custom_call.1} parent=11 // pred_region
          _
        $region24: #{tpu_custom_call.1} parent=11 // pred_fallthru
          _
        // Predicated region
        $region25: #{tpu_custom_call.1} parent=11 // pred_check
          %p315 = pneg %p247
        $region26: #{tpu_custom_call.1} parent=11 // pred_check_branch
          %317 = sbr.rel (%p315) target = $region28
        $region27: #{tpu_custom_call.1} parent=11 // pred_region
          _
        $region28: #{tpu_custom_call.1} parent=11 // pred_fallthru
          _
      $region12: #{tpu_custom_call.1} parent=5 // pred_fallthru
        _
      %p318 = scmp.lt.s32.totalorder %s28, 2
      // Predicated region
      $region29: #{tpu_custom_call.1} parent=5 // pred_check
        %p319 = pneg %p318
      $region30: #{tpu_custom_call.1} parent=5 // pred_check_branch
        %321 = sbr.rel (%p319) target = $region32
      $region31: #{tpu_custom_call.1} parent=5 // pred_region
        // Predicated region
        $region33: #{tpu_custom_call.1} parent=31 // pred_check
          %p322 = pneg %p113
        $region34: #{tpu_custom_call.1} parent=31 // pred_check_branch
          %324 = sbr.rel (%p322) target = $region36
        $region35: #{tpu_custom_call.1} parent=31 // pred_region
          %s325 = sand.u32 %s103, 1
          %s326 = scalar_lea.sflag [#allocation4], %s325
          %s327 = sand.u32 %s103, 1
          %s328 = smul.addr %s327, 96
          %s329 = scalar_lea.vmem [#allocation9], %s328
          %s330 = smul.u32 8, %s36
          %332 = vsyncadd %s326, 0
          %s333 = sadd.s32 %s37, %s330
          %s334 = smul.addr %s35, 24
          %s335 = sadd.s32 %s333, %s334
          %s336 = smul.addr %s335, 4
          %s337 = scalar_lea.hbm %s2, %s336
          %s338 = sshll.u32 %s337, 4
          %s339 = int_to_ptr.hbm [resolvable:$true] %s338
          %s340 = sshll.u32 %s329, 4
          %s341 = int_to_ptr.vmem [resolvable:$true] %s340
          %346 = dma.hbm_to_vmem [thread:$0]  %s339, 1536, %s341, %s326, 64, 64, 4
        $region36: #{tpu_custom_call.1} parent=31 // pred_fallthru
          _
        // Predicated region
        $region37: #{tpu_custom_call.1} parent=31 // pred_check
          %p347 = pneg %p143
        $region38: #{tpu_custom_call.1} parent=31 // pred_check_branch
          %349 = sbr.rel (%p347) target = $region40
        $region39: #{tpu_custom_call.1} parent=31 // pred_region
          %s350 = sand.u32 %s28, 1
          %s351 = scalar_lea.sflag [#allocation11], %s350
          %s352 = sand.u32 %s133, 1
          %s353 = smul.addr %s352, 96
          %s354 = scalar_lea.vmem [#allocation10], %s353
          %s355 = smul.u32 8, %s36
          %357 = vsyncadd %s351, 0
          %s358 = sadd.s32 %s37, %s355
          %s359 = smul.addr %s35, 24
          %s360 = sadd.s32 %s358, %s359
          %s361 = smul.addr %s360, 4
          %s362 = scalar_lea.hbm %s3, %s361
          %s363 = sshll.u32 %s362, 4
          %s364 = int_to_ptr.hbm [resolvable:$true] %s363
          %s365 = sshll.u32 %s354, 4
          %s366 = int_to_ptr.vmem [resolvable:$true] %s365
          %371 = dma.hbm_to_vmem [thread:$0]  %s364, 1536, %s366, %s351, 64, 64, 4
        $region40: #{tpu_custom_call.1} parent=31 // pred_fallthru
          _
        // Predicated region
        $region41: #{tpu_custom_call.1} parent=31 // pred_check
          %p372 = pneg %p173
        $region42: #{tpu_custom_call.1} parent=31 // pred_check_branch
          %374 = sbr.rel (%p372) target = $region44
        $region43: #{tpu_custom_call.1} parent=31 // pred_region
          %s375 = sand.u32 %s28, 1
          %s376 = scalar_lea.sflag [#allocation11], %s375
          %s377 = sand.u32 %s163, 1
          %s378 = smul.addr %s377, 96
          %s379 = scalar_lea.vmem [#allocation12], %s378
          %s380 = smul.u32 8, %s36
          %382 = vsyncadd %s376, 0
          %s383 = sadd.s32 %s37, %s380
          %s384 = smul.addr %s35, 24
          %s385 = sadd.s32 %s383, %s384
          %s386 = smul.addr %s385, 4
          %s387 = scalar_lea.hbm %s4, %s386
          %s388 = sshll.u32 %s387, 4
          %s389 = int_to_ptr.hbm [resolvable:$true] %s388
          %s390 = sshll.u32 %s379, 4
          %s391 = int_to_ptr.vmem [resolvable:$true] %s390
          %396 = dma.hbm_to_vmem [thread:$0]  %s389, 1536, %s391, %s376, 64, 64, 4
        $region44: #{tpu_custom_call.1} parent=31 // pred_fallthru
          _
        // Predicated region
        $region45: #{tpu_custom_call.1} parent=31 // pred_check
          %p397 = pneg %p199
        $region46: #{tpu_custom_call.1} parent=31 // pred_check_branch
          %399 = sbr.rel (%p397) target = $region48
        $region47: #{tpu_custom_call.1} parent=31 // pred_region
          %s400 = sand.u32 %s189, 1
          %s401 = scalar_lea.sflag [#allocation14], %s400
          %s402 = sand.u32 %s189, 1
          %s403 = smul.addr %s402, 24
          %s404 = scalar_lea.vmem [#allocation13], %s403
          %406 = vsyncadd %s401, 0
          %s407 = smul.addr %s35, 6
          %s408 = smul.addr %s407, 4
          %s409 = scalar_lea.hbm %s5, %s408
          %s410 = sshll.u32 %s409, 4
          %s411 = int_to_ptr.hbm [resolvable:$true] %s410
          %s412 = sshll.u32 %s404, 4
          %s413 = int_to_ptr.vmem [resolvable:$true] %s412
          %418 = dma.hbm_to_vmem [thread:$0]  %s411, 384, %s413, %s401, 64, 64, 4
        $region48: #{tpu_custom_call.1} parent=31 // pred_fallthru
          _
      $region32: #{tpu_custom_call.1} parent=5 // pred_fallthru
        _
      %p419 = scmp.le.s32.totalorder 1, %s28
      %p420 = scmp.lt.s32.totalorder %s28, 3
      %p421 = pnand %p419, %p420
      %p422 = pneg %p421
      // Predicated region
      $region49: #{tpu_custom_call.1} parent=5 // pred_check
        _
      $region50: #{tpu_custom_call.1} parent=5 // pred_check_branch
        %424 = sbr.rel (%p421) target = $region52
      $region51: #{tpu_custom_call.1} parent=5 // pred_region
        %s425 = ssub.s32 %s28, 1
        // Predicated region
        $region53: #{tpu_custom_call.1} parent=51 // pred_check
          %p426 = pneg %p68
        $region54: #{tpu_custom_call.1} parent=51 // pred_check_branch
          %428 = sbr.rel (%p426) target = $region56
        $region55: #{tpu_custom_call.1} parent=51 // pred_region
          %430 = dma.done [#allocation6], 64
        $region56: #{tpu_custom_call.1} parent=51 // pred_fallthru
          _
        // Predicated region
        $region57: #{tpu_custom_call.1} parent=51 // pred_check
          %p431 = pneg %p89
        $region58: #{tpu_custom_call.1} parent=51 // pred_check_branch
          %433 = sbr.rel (%p431) target = $region60
        $region59: #{tpu_custom_call.1} parent=51 // pred_region
          %435 = dma.done [#allocation8], 16
        $region60: #{tpu_custom_call.1} parent=51 // pred_fallthru
          _
        %s436 = sand.u32 %s106, 1
        %s437 = scalar_lea.sflag [#allocation4], %s436
        %s438 = sand.u32 %s106, 1
        %s439 = smul.addr %s438, 96
        %s440 = scalar_lea.vmem [#allocation9], %s439
        // Predicated region
        $region61: #{tpu_custom_call.1} parent=51 // pred_check
          %p441 = pneg %p119
        $region62: #{tpu_custom_call.1} parent=51 // pred_check_branch
          %443 = sbr.rel (%p441) target = $region64
        $region63: #{tpu_custom_call.1} parent=51 // pred_region
          %445 = dma.done %s437, 1536
        $region64: #{tpu_custom_call.1} parent=51 // pred_fallthru
          _
        %s446 = sand.u32 %s33, 1
        %s447 = scalar_lea.sflag [#allocation11], %s446
        %s448 = sand.u32 %s136, 1
        %s449 = smul.addr %s448, 96
        %s450 = scalar_lea.vmem [#allocation10], %s449
        // Predicated region
        $region65: #{tpu_custom_call.1} parent=51 // pred_check
          %p451 = pneg %p149
        $region66: #{tpu_custom_call.1} parent=51 // pred_check_branch
          %453 = sbr.rel (%p451) target = $region68
        $region67: #{tpu_custom_call.1} parent=51 // pred_region
          %455 = dma.done %s447, 1536
        $region68: #{tpu_custom_call.1} parent=51 // pred_fallthru
          _
        %s456 = sand.u32 %s33, 1
        %s457 = scalar_lea.sflag [#allocation11], %s456
        %s458 = sand.u32 %s166, 1
        %s459 = smul.addr %s458, 96
        %s460 = scalar_lea.vmem [#allocation12], %s459
        // Predicated region
        $region69: #{tpu_custom_call.1} parent=51 // pred_check
          %p461 = pneg %p179
        $region70: #{tpu_custom_call.1} parent=51 // pred_check_branch
          %463 = sbr.rel (%p461) target = $region72
        $region71: #{tpu_custom_call.1} parent=51 // pred_region
          %465 = dma.done %s457, 1536
        $region72: #{tpu_custom_call.1} parent=51 // pred_fallthru
          _
        %s466 = sand.u32 %s192, 1
        %s467 = scalar_lea.sflag [#allocation14], %s466
        %s468 = sand.u32 %s192, 1
        %s469 = smul.addr %s468, 24
        %s470 = scalar_lea.vmem [#allocation13], %s469
        // Predicated region
        $region73: #{tpu_custom_call.1} parent=51 // pred_check
          %p471 = pneg %p205
        $region74: #{tpu_custom_call.1} parent=51 // pred_check_branch
          %473 = sbr.rel (%p471) target = $region76
        $region75: #{tpu_custom_call.1} parent=51 // pred_region
          %475 = dma.done %s467, 384
        $region76: #{tpu_custom_call.1} parent=51 // pred_fallthru
          _
        %476 = sfence
        %p477 = pneg %p68
        %p478 = pneg %p65
        %p479 = pneg %p89
        %p480 = pneg %p86
        %s481 = sand.u32 %s106, 1
        %s482 = scalar_lea.sflag [#allocation4], %s481
        %s483 = sand.u32 %s106, 1
        %s484 = smul.addr %s483, 96
        %s485 = scalar_lea.vmem [#allocation9], %s484
        %p486 = pneg %p119
        %p487 = pneg %p116
        %s488 = sand.u32 %s33, 1
        %s489 = scalar_lea.sflag [#allocation11], %s488
        %s490 = sand.u32 %s136, 1
        %s491 = smul.addr %s490, 96
        %s492 = scalar_lea.vmem [#allocation10], %s491
        %p493 = pneg %p149
        %p494 = pneg %p146
        %s495 = sand.u32 %s33, 1
        %s496 = scalar_lea.sflag [#allocation11], %s495
        %s497 = sand.u32 %s166, 1
        %s498 = smul.addr %s497, 96
        %s499 = scalar_lea.vmem [#allocation12], %s498
        %p500 = pneg %p179
        %p501 = pneg %p176
        %s502 = sand.u32 %s192, 1
        %s503 = scalar_lea.sflag [#allocation14], %s502
        %s504 = sand.u32 %s192, 1
        %s505 = smul.addr %s504, 24
        %s506 = scalar_lea.vmem [#allocation13], %s505
        %p507 = pneg %p205
        %p508 = pneg %p202
        %p509 = pneg %p226
        %p510 = pneg %p223
        %p511 = pneg %p247
        %p512 = pneg %p244
        %p513 = pneg %p277
        %p514 = pneg %p274
        %s515 = sand.u32 %s264, 1
        %s516 = scalar_lea.sflag [#allocation5], %s515
        %s517 = sand.u32 %s264, 1
        %s518 = smul.addr %s517, 192
        %s519 = scalar_lea.vmem [#allocation15], %s518
        %s520 = smul.u32 8, %s39
        %s521 = smul.u32 8, %s39
        %s522 = smul.u32 8, %s39
        %s523 = smul.u32 8, %s39
        %s525 = smul.u32 %s39, 64
        %s526 = smul.u32 %s40, 128
        %p527 = scmp.eq.s32.totalorder %s40, 0
        // Predicated region
        $region77: #{tpu_custom_call.1} parent=51 // pred_check
          %p528 = pneg %p527
        $region78: #{tpu_custom_call.1} parent=51 // pred_check_branch
          %530 = sbr.rel (%p528) target = $region80
        $region79: #{tpu_custom_call.1} parent=51 // pred_region
          %s531 = sshra.s32 %s525, 3
          %s532 = sand.u32 %s525, 7
          %s533 = smul.addr %s531, 4
          %s534 = scalar_lea.vmem %s6, %s533
          %v535 = vld [vmem:[%s534] sm:$0xf]
          %v536 = vld [vmem:[%s534 + $0x4] sm:$0xf]
          %v537 = vld [vmem:[%s534 + $0x8] sm:$0xf]
          %v538 = vld [vmem:[%s534 + $0xc] sm:$0xf]
          %v539 = vld [vmem:[%s534 + $0x10] sm:$0xf]
          %v540 = vld [vmem:[%s534 + $0x14] sm:$0xf]
          %v541 = vld [vmem:[%s534 + $0x18] sm:$0xf]
          %v542 = vld [vmem:[%s534 + $0x1c] sm:$0xf]
          %v543 = vld [vmem:[%s470] sm:$0xf]
          %v544 = vld [vmem:[%s470 + $0x4] sm:$0xf]
          %v553 = vunpack.c.l.b16 %v535
          %v554 = vunpack.c.l.b16 %v536
          %v555 = vunpack.c.l.b16 %v537
          %v556 = vunpack.c.l.b16 %v538
          %v557 = vunpack.c.l.b16 %v539
          %v558 = vunpack.c.l.b16 %v540
          %v559 = vunpack.c.l.b16 %v541
          %v560 = vunpack.c.l.b16 %v542
          %v561 = vpack.c.b16 %v554, %v553
          %v562 = vpack.c.b16 %v556, %v555
          %v563 = vpack.c.b16 %v558, %v557
          %v564 = vpack.c.b16 %v560, %v559
          %v567 = vunpack.c.l.b16 %v543
          %v568 = vunpack.c.l.b16 %v544
          %v569 = vpack.c.b16 %v568, %v567
          %vm571 = vcmask 130048
          %v573 = vsel %vm571, %v561, 0
          %v576 = vsel %vm571, %v562, 0
          %v579 = vsel %vm571, %v563, 0
          %v582 = vsel %vm571, %v564, 0
          %584 = vmatpush.bf16.msra.mxu0 0
          %585 = vmatpush.bf16.msra.mxu0 0
          %586 = vmatpush.bf16.msra.mxu0 0
          %587 = vmatpush.bf16.msra.mxu0 0
          %588 = vmatpush.bf16.msra.mxu0 0
          %589 = vmatpush.bf16.msra.mxu0 0
          %590 = vmatpush.bf16.msra.mxu0 0
          %591 = vmatpush.bf16.msra.mxu0 %v569
          %592 = vmatmul.bf16.gmra.mxu0 %v573
          %v593 = vpop.f32.mrf.mxu0
          %v594 = vadd.f32 0.0, %v593
          %v595 = vpop.f32.mrf.mxu0
          %v596 = vadd.f32 0.0, %v595
          %597 = vmatmul.bf16.gmra.mxu0 %v576
          %v598 = vpop.f32.mrf.mxu0
          %v599 = vadd.f32 0.0, %v598
          %v600 = vpop.f32.mrf.mxu0
          %v601 = vadd.f32 0.0, %v600
          %602 = vmatmul.bf16.gmra.mxu0 %v579
          %v603 = vpop.f32.mrf.mxu0
          %v604 = vadd.f32 0.0, %v603
          %v605 = vpop.f32.mrf.mxu0
          %v606 = vadd.f32 0.0, %v605
          %607 = vmatmul.bf16.gmra.mxu0 %v582
          %v608 = vpop.f32.mrf.mxu0
          %v609 = vadd.f32 0.0, %v608
          %v610 = vpop.f32.mrf.mxu0
          %v611 = vadd.f32 0.0, %v610
          %612 = vdwg.mxu0
          %v613 = vpack.c.bf16 %v594, %v594
          %v614 = vpack.c.bf16 %v596, %v596
          %v615 = vpack.c.bf16 %v599, %v599
          %v616 = vpack.c.bf16 %v601, %v601
          %v617 = vpack.c.bf16 %v604, %v604
          %v618 = vpack.c.bf16 %v606, %v606
          %v619 = vpack.c.bf16 %v609, %v609
          %v620 = vpack.c.bf16 %v611, %v611
          %vm621 = vcmask 257024
          %622 = vst.msk [vmem:[#allocation2] sm:$0xf] %vm621, %v613
          %623 = vst.msk [vmem:[#allocation2 + $0x4] sm:$0xf] %vm621, %v614
          %624 = vst.msk [vmem:[#allocation2 + $0x8] sm:$0xf] %vm621, %v615
          %625 = vst.msk [vmem:[#allocation2 + $0xc] sm:$0xf] %vm621, %v616
          %626 = vst.msk [vmem:[#allocation2 + $0x10] sm:$0xf] %vm621, %v617
          %627 = vst.msk [vmem:[#allocation2 + $0x14] sm:$0xf] %vm621, %v618
          %628 = vst.msk [vmem:[#allocation2 + $0x18] sm:$0xf] %vm621, %v619
          %629 = vst.msk [vmem:[#allocation2 + $0x1c] sm:$0xf] %vm621, %v620
          %s630 = scalar_lea.vmem %s470, 8 [#allocation13]
          %v631 = vld [vmem:[%s630] sm:$0xf]
          %v632 = vld [vmem:[%s630 + $0x4] sm:$0xf]
          %v635 = vunpack.c.l.b16 %v631
          %v636 = vunpack.c.l.b16 %v632
          %v637 = vpack.c.b16 %v636, %v635
          %639 = vmatpush.bf16.msra.mxu0 0
          %640 = vmatpush.bf16.msra.mxu0 0
          %641 = vmatpush.bf16.msra.mxu0 0
          %642 = vmatpush.bf16.msra.mxu0 0
          %643 = vmatpush.bf16.msra.mxu0 0
          %644 = vmatpush.bf16.msra.mxu0 0
          %645 = vmatpush.bf16.msra.mxu0 0
          %646 = vmatpush.bf16.msra.mxu0 %v637
          %647 = vmatmul.bf16.gmra.mxu0 %v573
          %v648 = vpop.f32.mrf.mxu0
          %v649 = vadd.f32 0.0, %v648
          %v650 = vpop.f32.mrf.mxu0
          %v651 = vadd.f32 0.0, %v650
          %652 = vmatmul.bf16.gmra.mxu0 %v576
          %v653 = vpop.f32.mrf.mxu0
          %v654 = vadd.f32 0.0, %v653
          %v655 = vpop.f32.mrf.mxu0
          %v656 = vadd.f32 0.0, %v655
          %657 = vmatmul.bf16.gmra.mxu0 %v579
          %v658 = vpop.f32.mrf.mxu0
          %v659 = vadd.f32 0.0, %v658
          %v660 = vpop.f32.mrf.mxu0
          %v661 = vadd.f32 0.0, %v660
          %662 = vmatmul.bf16.gmra.mxu0 %v582
          %v663 = vpop.f32.mrf.mxu0
          %v664 = vadd.f32 0.0, %v663
          %v665 = vpop.f32.mrf.mxu0
          %v666 = vadd.f32 0.0, %v665
          %667 = vdwg.mxu0
          %v668 = vpack.c.bf16 %v649, %v649
          %v669 = vpack.c.bf16 %v651, %v651
          %v670 = vpack.c.bf16 %v654, %v654
          %v671 = vpack.c.bf16 %v656, %v656
          %v672 = vpack.c.bf16 %v659, %v659
          %v673 = vpack.c.bf16 %v661, %v661
          %v674 = vpack.c.bf16 %v664, %v664
          %v675 = vpack.c.bf16 %v666, %v666
          %s676 = scalar_lea.vmem [#allocation2], 32
          %677 = vst.msk [vmem:[%s676] sm:$0xf] %vm621, %v668
          %678 = vst.msk [vmem:[%s676 + $0x4] sm:$0xf] %vm621, %v669
          %679 = vst.msk [vmem:[%s676 + $0x8] sm:$0xf] %vm621, %v670
          %680 = vst.msk [vmem:[%s676 + $0xc] sm:$0xf] %vm621, %v671
          %681 = vst.msk [vmem:[%s676 + $0x10] sm:$0xf] %vm621, %v672
          %682 = vst.msk [vmem:[%s676 + $0x14] sm:$0xf] %vm621, %v673
          %683 = vst.msk [vmem:[%s676 + $0x18] sm:$0xf] %vm621, %v674
          %684 = vst.msk [vmem:[%s676 + $0x1c] sm:$0xf] %vm621, %v675
          %s685 = scalar_lea.vmem %s470, 16 [#allocation13]
          %v686 = vld [vmem:[%s685] sm:$0xf]
          %v687 = vld [vmem:[%s685 + $0x4] sm:$0xf]
          %v690 = vunpack.c.l.b16 %v686
          %v691 = vunpack.c.l.b16 %v687
          %v692 = vpack.c.b16 %v691, %v690
          %694 = vmatpush.bf16.msra.mxu0 0
          %695 = vmatpush.bf16.msra.mxu0 0
          %696 = vmatpush.bf16.msra.mxu0 0
          %697 = vmatpush.bf16.msra.mxu0 0
          %698 = vmatpush.bf16.msra.mxu0 0
          %699 = vmatpush.bf16.msra.mxu0 0
          %700 = vmatpush.bf16.msra.mxu0 0
          %701 = vmatpush.bf16.msra.mxu0 %v692
          %702 = vmatmul.bf16.gmra.mxu0 %v573
          %v703 = vpop.f32.mrf.mxu0
          %v704 = vadd.f32 0.0, %v703
          %v705 = vpop.f32.mrf.mxu0
          %v706 = vadd.f32 0.0, %v705
          %707 = vmatmul.bf16.gmra.mxu0 %v576
          %v708 = vpop.f32.mrf.mxu0
          %v709 = vadd.f32 0.0, %v708
          %v710 = vpop.f32.mrf.mxu0
          %v711 = vadd.f32 0.0, %v710
          %712 = vmatmul.bf16.gmra.mxu0 %v579
          %v713 = vpop.f32.mrf.mxu0
          %v714 = vadd.f32 0.0, %v713
          %v715 = vpop.f32.mrf.mxu0
          %v716 = vadd.f32 0.0, %v715
          %717 = vmatmul.bf16.gmra.mxu0 %v582
          %v718 = vpop.f32.mrf.mxu0
          %v719 = vadd.f32 0.0, %v718
          %v720 = vpop.f32.mrf.mxu0
          %v721 = vadd.f32 0.0, %v720
          %722 = vdwg.mxu0
          %v723 = vpack.c.bf16 %v704, %v704
          %v724 = vpack.c.bf16 %v706, %v706
          %v725 = vpack.c.bf16 %v709, %v709
          %v726 = vpack.c.bf16 %v711, %v711
          %v727 = vpack.c.bf16 %v714, %v714
          %v728 = vpack.c.bf16 %v716, %v716
          %v729 = vpack.c.bf16 %v719, %v719
          %v730 = vpack.c.bf16 %v721, %v721
          %s731 = scalar_lea.vmem [#allocation2], 64
          %732 = vst.msk [vmem:[%s731] sm:$0xf] %vm621, %v723
          %733 = vst.msk [vmem:[%s731 + $0x4] sm:$0xf] %vm621, %v724
          %734 = vst.msk [vmem:[%s731 + $0x8] sm:$0xf] %vm621, %v725
          %735 = vst.msk [vmem:[%s731 + $0xc] sm:$0xf] %vm621, %v726
          %736 = vst.msk [vmem:[%s731 + $0x10] sm:$0xf] %vm621, %v727
          %737 = vst.msk [vmem:[%s731 + $0x14] sm:$0xf] %vm621, %v728
          %738 = vst.msk [vmem:[%s731 + $0x18] sm:$0xf] %vm621, %v729
          %739 = vst.msk [vmem:[%s731 + $0x1c] sm:$0xf] %vm621, %v730
        $region80: #{tpu_custom_call.1} parent=51 // pred_fallthru
          _
        %s740 = sshra.s32 %s526, 7
        %s741 = sand.u32 %s526, 127
        %s742 = smul.addr %s740, 4
        %s743 = scalar_lea.vmem %s7, %s742
        %v744 = vld [vmem:[%s743] sm:$0xf]
        %v745 = vld [vmem:[%s743 + $0x4] sm:$0xf]
        %v746 = vld [vmem:[%s743 + $0x8] sm:$0xf]
        %v747 = vld [vmem:[%s743 + $0xc] sm:$0xf]
        %v748 = vld [vmem:[#allocation2] sm:$0xf]
        %v749 = vld [vmem:[#allocation2 + $0x4] sm:$0xf]
        %v750 = vld [vmem:[#allocation2 + $0x8] sm:$0xf]
        %v751 = vld [vmem:[#allocation2 + $0xc] sm:$0xf]
        %v752 = vld [vmem:[#allocation2 + $0x10] sm:$0xf]
        %v753 = vld [vmem:[#allocation2 + $0x14] sm:$0xf]
        %v754 = vld [vmem:[#allocation2 + $0x18] sm:$0xf]
        %v755 = vld [vmem:[#allocation2 + $0x1c] sm:$0xf]
        %v764 = vunpack.c.l.b16 %v748
        %v765 = vunpack.c.l.b16 %v749
        %v766 = vunpack.c.l.b16 %v750
        %v767 = vunpack.c.l.b16 %v751
        %v768 = vunpack.c.l.b16 %v752
        %v769 = vunpack.c.l.b16 %v753
        %v770 = vunpack.c.l.b16 %v754
        %v771 = vunpack.c.l.b16 %v755
        %v772 = vpack.c.b16 %v765, %v764
        %v773 = vpack.c.b16 %v767, %v766
        %v774 = vpack.c.b16 %v769, %v768
        %v775 = vpack.c.b16 %v771, %v770
        %v780 = vunpack.c.l.b16 %v744
        %v781 = vunpack.c.l.b16 %v745
        %v782 = vunpack.c.l.b16 %v746
        %v783 = vunpack.c.l.b16 %v747
        %v784 = vpack.c.b16 %v781, %v780
        %v785 = vpack.c.b16 %v783, %v782
        %vm788 = vcmask 261120
        %v790 = vsel %vm788, %v772, 0
        %v793 = vsel %vm788, %v773, 0
        %v796 = vsel %vm788, %v774, 0
        %v799 = vsel %vm788, %v775, 0
        %801 = vmatpush.bf16.msra.mxu0 0
        %802 = vmatpush.bf16.msra.mxu0 0
        %803 = vmatpush.bf16.msra.mxu0 0
        %804 = vmatpush.bf16.msra.mxu0 0
        %805 = vmatpush.bf16.msra.mxu0 0
        %806 = vmatpush.bf16.msra.mxu0 0
        %807 = vmatpush.bf16.msra.mxu0 %v785
        %808 = vmatpush.bf16.msra.mxu0 %v784
        %809 = vmatmul.bf16.gmra.mxu0 %v790
        %v810 = vpop.f32.mrf.mxu0
        %v811 = vadd.f32 0.0, %v810
        %v812 = vpop.f32.mrf.mxu0
        %v813 = vadd.f32 0.0, %v812
        %814 = vmatmul.bf16.gmra.mxu0 %v793
        %v815 = vpop.f32.mrf.mxu0
        %v816 = vadd.f32 0.0, %v815
        %v817 = vpop.f32.mrf.mxu0
        %v818 = vadd.f32 0.0, %v817
        %819 = vmatmul.bf16.gmra.mxu0 %v796
        %v820 = vpop.f32.mrf.mxu0
        %v821 = vadd.f32 0.0, %v820
        %v822 = vpop.f32.mrf.mxu0
        %v823 = vadd.f32 0.0, %v822
        %824 = vmatmul.bf16.gmra.mxu0 %v799
        %v825 = vpop.f32.mrf.mxu0
        %v826 = vadd.f32 0.0, %v825
        %v827 = vpop.f32.mrf.mxu0
        %v828 = vadd.f32 0.0, %v827
        %829 = vdwg.mxu0
        %s830 = sld [smem:[#allocation3]]
        %v831 = vld [vmem:[%s440] sm:$0xf]
        %v832 = vld [vmem:[%s440 + $0x4] sm:$0xf]
        %v833 = vld [vmem:[%s440 + $0x8] sm:$0xf]
        %v834 = vld [vmem:[%s440 + $0xc] sm:$0xf]
        %v835 = vld [vmem:[%s440 + $0x10] sm:$0xf]
        %v836 = vld [vmem:[%s440 + $0x14] sm:$0xf]
        %v837 = vld [vmem:[%s440 + $0x18] sm:$0xf]
        %v838 = vld [vmem:[%s440 + $0x1c] sm:$0xf]
        %v839 = vunpack.c.l.bf16 %v831
        %v840 = vunpack.c.l.bf16 %v832
        %v841 = vunpack.c.l.bf16 %v833
        %v842 = vunpack.c.l.bf16 %v834
        %v843 = vunpack.c.l.bf16 %v835
        %v844 = vunpack.c.l.bf16 %v836
        %v845 = vunpack.c.l.bf16 %v837
        %v846 = vunpack.c.l.bf16 %v838
        %v847 = vstv %s830
        %v848 = vmul.f32 %v847, %v839
        %v849 = vmul.f32 %v847, %v840
        %v850 = vmul.f32 %v847, %v841
        %v851 = vmul.f32 %v847, %v842
        %v852 = vmul.f32 %v847, %v843
        %v853 = vmul.f32 %v847, %v844
        %v854 = vmul.f32 %v847, %v845
        %v855 = vmul.f32 %v847, %v846
        %s856 = sld [smem:[#allocation3 + $0x1]]
        %s857 = scalar_lea.vmem %s440, 32 [#allocation9]
        %v858 = vld [vmem:[%s857] sm:$0xf]
        %v859 = vld [vmem:[%s857 + $0x4] sm:$0xf]
        %v860 = vld [vmem:[%s857 + $0x8] sm:$0xf]
        %v861 = vld [vmem:[%s857 + $0xc] sm:$0xf]
        %v862 = vld [vmem:[%s857 + $0x10] sm:$0xf]
        %v863 = vld [vmem:[%s857 + $0x14] sm:$0xf]
        %v864 = vld [vmem:[%s857 + $0x18] sm:$0xf]
        %v865 = vld [vmem:[%s857 + $0x1c] sm:$0xf]
        %v866 = vunpack.c.l.bf16 %v858
        %v867 = vunpack.c.l.bf16 %v859
        %v868 = vunpack.c.l.bf16 %v860
        %v869 = vunpack.c.l.bf16 %v861
        %v870 = vunpack.c.l.bf16 %v862
        %v871 = vunpack.c.l.bf16 %v863
        %v872 = vunpack.c.l.bf16 %v864
        %v873 = vunpack.c.l.bf16 %v865
        %v874 = vstv %s856
        %v875 = vmul.f32 %v874, %v866
        %v876 = vmul.f32 %v874, %v867
        %v877 = vmul.f32 %v874, %v868
        %v878 = vmul.f32 %v874, %v869
        %v879 = vmul.f32 %v874, %v870
        %v880 = vmul.f32 %v874, %v871
        %v881 = vmul.f32 %v874, %v872
        %v882 = vmul.f32 %v874, %v873
        %v883 = vadd.f32 %v848, %v875
        %v884 = vadd.f32 %v849, %v876
        %v885 = vadd.f32 %v850, %v877
        %v886 = vadd.f32 %v851, %v878
        %v887 = vadd.f32 %v852, %v879
        %v888 = vadd.f32 %v853, %v880
        %v889 = vadd.f32 %v854, %v881
        %v890 = vadd.f32 %v855, %v882
        %s891 = sld [smem:[#allocation3 + $0x2]]
        %s892 = scalar_lea.vmem %s440, 64 [#allocation9]
        %v893 = vld [vmem:[%s892] sm:$0xf]
        %v894 = vld [vmem:[%s892 + $0x4] sm:$0xf]
        %v895 = vld [vmem:[%s892 + $0x8] sm:$0xf]
        %v896 = vld [vmem:[%s892 + $0xc] sm:$0xf]
        %v897 = vld [vmem:[%s892 + $0x10] sm:$0xf]
        %v898 = vld [vmem:[%s892 + $0x14] sm:$0xf]
        %v899 = vld [vmem:[%s892 + $0x18] sm:$0xf]
        %v900 = vld [vmem:[%s892 + $0x1c] sm:$0xf]
        %v901 = vunpack.c.l.bf16 %v893
        %v902 = vunpack.c.l.bf16 %v894
        %v903 = vunpack.c.l.bf16 %v895
        %v904 = vunpack.c.l.bf16 %v896
        %v905 = vunpack.c.l.bf16 %v897
        %v906 = vunpack.c.l.bf16 %v898
        %v907 = vunpack.c.l.bf16 %v899
        %v908 = vunpack.c.l.bf16 %v900
        %v909 = vstv %s891
        %v910 = vmul.f32 %v909, %v901
        %v911 = vmul.f32 %v909, %v902
        %v912 = vmul.f32 %v909, %v903
        %v913 = vmul.f32 %v909, %v904
        %v914 = vmul.f32 %v909, %v905
        %v915 = vmul.f32 %v909, %v906
        %v916 = vmul.f32 %v909, %v907
        %v917 = vmul.f32 %v909, %v908
        %v918 = vadd.f32 %v883, %v910
        %v919 = vadd.f32 %v884, %v911
        %v920 = vadd.f32 %v885, %v912
        %v921 = vadd.f32 %v886, %v913
        %v922 = vadd.f32 %v887, %v914
        %v923 = vadd.f32 %v888, %v915
        %v924 = vadd.f32 %v889, %v916
        %v925 = vadd.f32 %v890, %v917
        %s926 = sld [smem:[#allocation3 + $0x3]]
        %v927 = vld [vmem:[%s450] sm:$0xf]
        %v928 = vld [vmem:[%s450 + $0x4] sm:$0xf]
        %v929 = vld [vmem:[%s450 + $0x8] sm:$0xf]
        %v930 = vld [vmem:[%s450 + $0xc] sm:$0xf]
        %v931 = vld [vmem:[%s450 + $0x10] sm:$0xf]
        %v932 = vld [vmem:[%s450 + $0x14] sm:$0xf]
        %v933 = vld [vmem:[%s450 + $0x18] sm:$0xf]
        %v934 = vld [vmem:[%s450 + $0x1c] sm:$0xf]
        %v935 = vunpack.c.l.bf16 %v927
        %v936 = vunpack.c.l.bf16 %v928
        %v937 = vunpack.c.l.bf16 %v929
        %v938 = vunpack.c.l.bf16 %v930
        %v939 = vunpack.c.l.bf16 %v931
        %v940 = vunpack.c.l.bf16 %v932
        %v941 = vunpack.c.l.bf16 %v933
        %v942 = vunpack.c.l.bf16 %v934
        %v943 = vstv %s926
        %v944 = vmul.f32 %v943, %v935
        %v945 = vmul.f32 %v943, %v936
        %v946 = vmul.f32 %v943, %v937
        %v947 = vmul.f32 %v943, %v938
        %v948 = vmul.f32 %v943, %v939
        %v949 = vmul.f32 %v943, %v940
        %v950 = vmul.f32 %v943, %v941
        %v951 = vmul.f32 %v943, %v942
        %v952 = vadd.f32 %v918, %v944
        %v953 = vadd.f32 %v919, %v945
        %v954 = vadd.f32 %v920, %v946
        %v955 = vadd.f32 %v921, %v947
        %v956 = vadd.f32 %v922, %v948
        %v957 = vadd.f32 %v923, %v949
        %v958 = vadd.f32 %v924, %v950
        %v959 = vadd.f32 %v925, %v951
        %s960 = sld [smem:[#allocation3 + $0x4]]
        %s961 = scalar_lea.vmem %s450, 32 [#allocation10]
        %v962 = vld [vmem:[%s961] sm:$0xf]
        %v963 = vld [vmem:[%s961 + $0x4] sm:$0xf]
        %v964 = vld [vmem:[%s961 + $0x8] sm:$0xf]
        %v965 = vld [vmem:[%s961 + $0xc] sm:$0xf]
        %v966 = vld [vmem:[%s961 + $0x10] sm:$0xf]
        %v967 = vld [vmem:[%s961 + $0x14] sm:$0xf]
        %v968 = vld [vmem:[%s961 + $0x18] sm:$0xf]
        %v969 = vld [vmem:[%s961 + $0x1c] sm:$0xf]
        %v970 = vunpack.c.l.bf16 %v962
        %v971 = vunpack.c.l.bf16 %v963
        %v972 = vunpack.c.l.bf16 %v964
        %v973 = vunpack.c.l.bf16 %v965
        %v974 = vunpack.c.l.bf16 %v966
        %v975 = vunpack.c.l.bf16 %v967
        %v976 = vunpack.c.l.bf16 %v968
        %v977 = vunpack.c.l.bf16 %v969
        %v978 = vstv %s960
        %v979 = vmul.f32 %v978, %v970
        %v980 = vmul.f32 %v978, %v971
        %v981 = vmul.f32 %v978, %v972
        %v982 = vmul.f32 %v978, %v973
        %v983 = vmul.f32 %v978, %v974
        %v984 = vmul.f32 %v978, %v975
        %v985 = vmul.f32 %v978, %v976
        %v986 = vmul.f32 %v978, %v977
        %v987 = vadd.f32 %v952, %v979
        %v988 = vadd.f32 %v953, %v980
        %v989 = vadd.f32 %v954, %v981
        %v990 = vadd.f32 %v955, %v982
        %v991 = vadd.f32 %v956, %v983
        %v992 = vadd.f32 %v957, %v984
        %v993 = vadd.f32 %v958, %v985
        %v994 = vadd.f32 %v959, %v986
        %s995 = sld [smem:[#allocation3 + $0x5]]
        %s996 = scalar_lea.vmem %s450, 64 [#allocation10]
        %v997 = vld [vmem:[%s996] sm:$0xf]
        %v998 = vld [vmem:[%s996 + $0x4] sm:$0xf]
        %v999 = vld [vmem:[%s996 + $0x8] sm:$0xf]
        %v1000 = vld [vmem:[%s996 + $0xc] sm:$0xf]
        %v1001 = vld [vmem:[%s996 + $0x10] sm:$0xf]
        %v1002 = vld [vmem:[%s996 + $0x14] sm:$0xf]
        %v1003 = vld [vmem:[%s996 + $0x18] sm:$0xf]
        %v1004 = vld [vmem:[%s996 + $0x1c] sm:$0xf]
        %v1005 = vunpack.c.l.bf16 %v997
        %v1006 = vunpack.c.l.bf16 %v998
        %v1007 = vunpack.c.l.bf16 %v999
        %v1008 = vunpack.c.l.bf16 %v1000
        %v1009 = vunpack.c.l.bf16 %v1001
        %v1010 = vunpack.c.l.bf16 %v1002
        %v1011 = vunpack.c.l.bf16 %v1003
        %v1012 = vunpack.c.l.bf16 %v1004
        %v1013 = vstv %s995
        %v1014 = vmul.f32 %v1013, %v1005
        %v1015 = vmul.f32 %v1013, %v1006
        %v1016 = vmul.f32 %v1013, %v1007
        %v1017 = vmul.f32 %v1013, %v1008
        %v1018 = vmul.f32 %v1013, %v1009
        %v1019 = vmul.f32 %v1013, %v1010
        %v1020 = vmul.f32 %v1013, %v1011
        %v1021 = vmul.f32 %v1013, %v1012
        %v1022 = vadd.f32 %v987, %v1014
        %v1023 = vadd.f32 %v988, %v1015
        %v1024 = vadd.f32 %v989, %v1016
        %v1025 = vadd.f32 %v990, %v1017
        %v1026 = vadd.f32 %v991, %v1018
        %v1027 = vadd.f32 %v992, %v1019
        %v1028 = vadd.f32 %v993, %v1020
        %v1029 = vadd.f32 %v994, %v1021
        %s1030 = sld [smem:[#allocation3 + $0x6]]
        %v1031 = vld [vmem:[%s460] sm:$0xf]
        %v1032 = vld [vmem:[%s460 + $0x4] sm:$0xf]
        %v1033 = vld [vmem:[%s460 + $0x8] sm:$0xf]
        %v1034 = vld [vmem:[%s460 + $0xc] sm:$0xf]
        %v1035 = vld [vmem:[%s460 + $0x10] sm:$0xf]
        %v1036 = vld [vmem:[%s460 + $0x14] sm:$0xf]
        %v1037 = vld [vmem:[%s460 + $0x18] sm:$0xf]
        %v1038 = vld [vmem:[%s460 + $0x1c] sm:$0xf]
        %v1039 = vunpack.c.l.bf16 %v1031
        %v1040 = vunpack.c.l.bf16 %v1032
        %v1041 = vunpack.c.l.bf16 %v1033
        %v1042 = vunpack.c.l.bf16 %v1034
        %v1043 = vunpack.c.l.bf16 %v1035
        %v1044 = vunpack.c.l.bf16 %v1036
        %v1045 = vunpack.c.l.bf16 %v1037
        %v1046 = vunpack.c.l.bf16 %v1038
        %v1047 = vstv %s1030
        %v1048 = vmul.f32 %v1047, %v1039
        %v1049 = vmul.f32 %v1047, %v1040
        %v1050 = vmul.f32 %v1047, %v1041
        %v1051 = vmul.f32 %v1047, %v1042
        %v1052 = vmul.f32 %v1047, %v1043
        %v1053 = vmul.f32 %v1047, %v1044
        %v1054 = vmul.f32 %v1047, %v1045
        %v1055 = vmul.f32 %v1047, %v1046
        %v1056 = vadd.f32 %v1022, %v1048
        %v1057 = vadd.f32 %v1023, %v1049
        %v1058 = vadd.f32 %v1024, %v1050
        %v1059 = vadd.f32 %v1025, %v1051
        %v1060 = vadd.f32 %v1026, %v1052
        %v1061 = vadd.f32 %v1027, %v1053
        %v1062 = vadd.f32 %v1028, %v1054
        %v1063 = vadd.f32 %v1029, %v1055
        %s1064 = sld [smem:[#allocation3 + $0x7]]
        %s1065 = scalar_lea.vmem %s460, 32 [#allocation12]
        %v1066 = vld [vmem:[%s1065] sm:$0xf]
        %v1067 = vld [vmem:[%s1065 + $0x4] sm:$0xf]
        %v1068 = vld [vmem:[%s1065 + $0x8] sm:$0xf]
        %v1069 = vld [vmem:[%s1065 + $0xc] sm:$0xf]
        %v1070 = vld [vmem:[%s1065 + $0x10] sm:$0xf]
        %v1071 = vld [vmem:[%s1065 + $0x14] sm:$0xf]
        %v1072 = vld [vmem:[%s1065 + $0x18] sm:$0xf]
        %v1073 = vld [vmem:[%s1065 + $0x1c] sm:$0xf]
        %v1074 = vunpack.c.l.bf16 %v1066
        %v1075 = vunpack.c.l.bf16 %v1067
        %v1076 = vunpack.c.l.bf16 %v1068
        %v1077 = vunpack.c.l.bf16 %v1069
        %v1078 = vunpack.c.l.bf16 %v1070
        %v1079 = vunpack.c.l.bf16 %v1071
        %v1080 = vunpack.c.l.bf16 %v1072
        %v1081 = vunpack.c.l.bf16 %v1073
        %v1082 = vstv %s1064
        %v1083 = vmul.f32 %v1082, %v1074
        %v1084 = vmul.f32 %v1082, %v1075
        %v1085 = vmul.f32 %v1082, %v1076
        %v1086 = vmul.f32 %v1082, %v1077
        %v1087 = vmul.f32 %v1082, %v1078
        %v1088 = vmul.f32 %v1082, %v1079
        %v1089 = vmul.f32 %v1082, %v1080
        %v1090 = vmul.f32 %v1082, %v1081
        %v1091 = vadd.f32 %v1056, %v1083
        %v1092 = vadd.f32 %v1057, %v1084
        %v1093 = vadd.f32 %v1058, %v1085
        %v1094 = vadd.f32 %v1059, %v1086
        %v1095 = vadd.f32 %v1060, %v1087
        %v1096 = vadd.f32 %v1061, %v1088
        %v1097 = vadd.f32 %v1062, %v1089
        %v1098 = vadd.f32 %v1063, %v1090
        %s1099 = sld [smem:[#allocation3 + $0x8]]
        %s1100 = scalar_lea.vmem %s460, 64 [#allocation12]
        %v1101 = vld [vmem:[%s1100] sm:$0xf]
        %v1102 = vld [vmem:[%s1100 + $0x4] sm:$0xf]
        %v1103 = vld [vmem:[%s1100 + $0x8] sm:$0xf]
        %v1104 = vld [vmem:[%s1100 + $0xc] sm:$0xf]
        %v1105 = vld [vmem:[%s1100 + $0x10] sm:$0xf]
        %v1106 = vld [vmem:[%s1100 + $0x14] sm:$0xf]
        %v1107 = vld [vmem:[%s1100 + $0x18] sm:$0xf]
        %v1108 = vld [vmem:[%s1100 + $0x1c] sm:$0xf]
        %v1109 = vunpack.c.l.bf16 %v1101
        %v1110 = vunpack.c.l.bf16 %v1102
        %v1111 = vunpack.c.l.bf16 %v1103
        %v1112 = vunpack.c.l.bf16 %v1104
        %v1113 = vunpack.c.l.bf16 %v1105
        %v1114 = vunpack.c.l.bf16 %v1106
        %v1115 = vunpack.c.l.bf16 %v1107
        %v1116 = vunpack.c.l.bf16 %v1108
        %v1117 = vstv %s1099
        %v1118 = vmul.f32 %v1117, %v1109
        %v1119 = vmul.f32 %v1117, %v1110
        %v1120 = vmul.f32 %v1117, %v1111
        %v1121 = vmul.f32 %v1117, %v1112
        %v1122 = vmul.f32 %v1117, %v1113
        %v1123 = vmul.f32 %v1117, %v1114
        %v1124 = vmul.f32 %v1117, %v1115
        %v1125 = vmul.f32 %v1117, %v1116
        %v1126 = vadd.f32 %v1091, %v1118
        %v1127 = vadd.f32 %v1092, %v1119
        %v1128 = vadd.f32 %v1093, %v1120
        %v1129 = vadd.f32 %v1094, %v1121
        %v1130 = vadd.f32 %v1095, %v1122
        %v1131 = vadd.f32 %v1096, %v1123
        %v1132 = vadd.f32 %v1097, %v1124
        %v1133 = vadd.f32 %v1098, %v1125
        %s1134 = sld [smem:[#allocation7]]
        %v1135 = vstv %s1134
        %v1136 = vadd.f32 %v1126, %v1135
        %v1137 = vadd.f32 %v1127, %v1135
        %v1138 = vadd.f32 %v1128, %v1135
        %v1139 = vadd.f32 %v1129, %v1135
        %v1140 = vadd.f32 %v1130, %v1135
        %v1141 = vadd.f32 %v1131, %v1135
        %v1142 = vadd.f32 %v1132, %v1135
        %v1143 = vadd.f32 %v1133, %v1135
        %v1144 = vmul.f32 %v1136, 0.1
        %v1145 = vmul.f32 %v1137, 0.1
        %v1146 = vmul.f32 %v1138, 0.1
        %v1147 = vmul.f32 %v1139, 0.1
        %v1148 = vmul.f32 %v1140, 0.1
        %v1149 = vmul.f32 %v1141, 0.1
        %v1150 = vmul.f32 %v1142, 0.1
        %v1151 = vmul.f32 %v1143, 0.1
        %v1152 = vmax.f32 %v1136, %v1144
        %v1153 = vmax.f32 %v1137, %v1145
        %v1154 = vmax.f32 %v1138, %v1146
        %v1155 = vmax.f32 %v1139, %v1147
        %v1156 = vmax.f32 %v1140, %v1148
        %v1157 = vmax.f32 %v1141, %v1149
        %v1158 = vmax.f32 %v1142, %v1150
        %v1159 = vmax.f32 %v1143, %v1151
        %v1160 = vadd.f32 %v1152, %v811
        %v1161 = vadd.f32 %v1153, %v813
        %v1162 = vadd.f32 %v1154, %v816
        %v1163 = vadd.f32 %v1155, %v818
        %v1164 = vadd.f32 %v1156, %v821
        %v1165 = vadd.f32 %v1157, %v823
        %v1166 = vadd.f32 %v1158, %v826
        %v1167 = vadd.f32 %v1159, %v828
        %1168 = vst [vmem:[%s519] sm:$0xff] %v1160
        %1169 = vst [vmem:[%s519 + $0x8] sm:$0xff] %v1161
        %1170 = vst [vmem:[%s519 + $0x10] sm:$0xff] %v1162
        %1171 = vst [vmem:[%s519 + $0x18] sm:$0xff] %v1163
        %1172 = vst [vmem:[%s519 + $0x20] sm:$0xff] %v1164
        %1173 = vst [vmem:[%s519 + $0x28] sm:$0xff] %v1165
        %1174 = vst [vmem:[%s519 + $0x30] sm:$0xff] %v1166
        %1175 = vst [vmem:[%s519 + $0x38] sm:$0xff] %v1167
        %s1176 = scalar_lea.vmem [#allocation2], 32
        %v1177 = vld [vmem:[%s1176] sm:$0xf]
        %v1178 = vld [vmem:[%s1176 + $0x4] sm:$0xf]
        %v1179 = vld [vmem:[%s1176 + $0x8] sm:$0xf]
        %v1180 = vld [vmem:[%s1176 + $0xc] sm:$0xf]
        %v1181 = vld [vmem:[%s1176 + $0x10] sm:$0xf]
        %v1182 = vld [vmem:[%s1176 + $0x14] sm:$0xf]
        %v1183 = vld [vmem:[%s1176 + $0x18] sm:$0xf]
        %v1184 = vld [vmem:[%s1176 + $0x1c] sm:$0xf]
        %v1193 = vunpack.c.l.b16 %v1177
        %v1194 = vunpack.c.l.b16 %v1178
        %v1195 = vunpack.c.l.b16 %v1179
        %v1196 = vunpack.c.l.b16 %v1180
        %v1197 = vunpack.c.l.b16 %v1181
        %v1198 = vunpack.c.l.b16 %v1182
        %v1199 = vunpack.c.l.b16 %v1183
        %v1200 = vunpack.c.l.b16 %v1184
        %v1201 = vpack.c.b16 %v1194, %v1193
        %v1202 = vpack.c.b16 %v1196, %v1195
        %v1203 = vpack.c.b16 %v1198, %v1197
        %v1204 = vpack.c.b16 %v1200, %v1199
        %v1206 = vsel %vm788, %v1201, 0
        %v1209 = vsel %vm788, %v1202, 0
        %v1212 = vsel %vm788, %v1203, 0
        %v1215 = vsel %vm788, %v1204, 0
        %1217 = vmatpush.bf16.msra.mxu0 0
        %1218 = vmatpush.bf16.msra.mxu0 0
        %1219 = vmatpush.bf16.msra.mxu0 0
        %1220 = vmatpush.bf16.msra.mxu0 0
        %1221 = vmatpush.bf16.msra.mxu0 0
        %1222 = vmatpush.bf16.msra.mxu0 0
        %1223 = vmatpush.bf16.msra.mxu0 %v785
        %1224 = vmatpush.bf16.msra.mxu0 %v784
        %1225 = vmatmul.bf16.gmra.mxu0 %v1206
        %v1226 = vpop.f32.mrf.mxu0
        %v1227 = vadd.f32 0.0, %v1226
        %v1228 = vpop.f32.mrf.mxu0
        %v1229 = vadd.f32 0.0, %v1228
        %1230 = vmatmul.bf16.gmra.mxu0 %v1209
        %v1231 = vpop.f32.mrf.mxu0
        %v1232 = vadd.f32 0.0, %v1231
        %v1233 = vpop.f32.mrf.mxu0
        %v1234 = vadd.f32 0.0, %v1233
        %1235 = vmatmul.bf16.gmra.mxu0 %v1212
        %v1236 = vpop.f32.mrf.mxu0
        %v1237 = vadd.f32 0.0, %v1236
        %v1238 = vpop.f32.mrf.mxu0
        %v1239 = vadd.f32 0.0, %v1238
        %1240 = vmatmul.bf16.gmra.mxu0 %v1215
        %v1241 = vpop.f32.mrf.mxu0
        %v1242 = vadd.f32 0.0, %v1241
        %v1243 = vpop.f32.mrf.mxu0
        %v1244 = vadd.f32 0.0, %v1243
        %1245 = vdwg.mxu0
        %s1246 = sld [smem:[#allocation3 + $0x80]]
        %v1247 = vld [vmem:[%s440] sm:$0xf]
        %v1248 = vld [vmem:[%s440 + $0x4] sm:$0xf]
        %v1249 = vld [vmem:[%s440 + $0x8] sm:$0xf]
        %v1250 = vld [vmem:[%s440 + $0xc] sm:$0xf]
        %v1251 = vld [vmem:[%s440 + $0x10] sm:$0xf]
        %v1252 = vld [vmem:[%s440 + $0x14] sm:$0xf]
        %v1253 = vld [vmem:[%s440 + $0x18] sm:$0xf]
        %v1254 = vld [vmem:[%s440 + $0x1c] sm:$0xf]
        %v1255 = vunpack.c.l.bf16 %v1247
        %v1256 = vunpack.c.l.bf16 %v1248
        %v1257 = vunpack.c.l.bf16 %v1249
        %v1258 = vunpack.c.l.bf16 %v1250
        %v1259 = vunpack.c.l.bf16 %v1251
        %v1260 = vunpack.c.l.bf16 %v1252
        %v1261 = vunpack.c.l.bf16 %v1253
        %v1262 = vunpack.c.l.bf16 %v1254
        %v1263 = vstv %s1246
        %v1264 = vmul.f32 %v1263, %v1255
        %v1265 = vmul.f32 %v1263, %v1256
        %v1266 = vmul.f32 %v1263, %v1257
        %v1267 = vmul.f32 %v1263, %v1258
        %v1268 = vmul.f32 %v1263, %v1259
        %v1269 = vmul.f32 %v1263, %v1260
        %v1270 = vmul.f32 %v1263, %v1261
        %v1271 = vmul.f32 %v1263, %v1262
        %s1272 = sld [smem:[#allocation3 + $0x81]]
        %v1273 = vld [vmem:[%s857] sm:$0xf]
        %v1274 = vld [vmem:[%s857 + $0x4] sm:$0xf]
        %v1275 = vld [vmem:[%s857 + $0x8] sm:$0xf]
        %v1276 = vld [vmem:[%s857 + $0xc] sm:$0xf]
        %v1277 = vld [vmem:[%s857 + $0x10] sm:$0xf]
        %v1278 = vld [vmem:[%s857 + $0x14] sm:$0xf]
        %v1279 = vld [vmem:[%s857 + $0x18] sm:$0xf]
        %v1280 = vld [vmem:[%s857 + $0x1c] sm:$0xf]
        %v1281 = vunpack.c.l.bf16 %v1273
        %v1282 = vunpack.c.l.bf16 %v1274
        %v1283 = vunpack.c.l.bf16 %v1275
        %v1284 = vunpack.c.l.bf16 %v1276
        %v1285 = vunpack.c.l.bf16 %v1277
        %v1286 = vunpack.c.l.bf16 %v1278
        %v1287 = vunpack.c.l.bf16 %v1279
        %v1288 = vunpack.c.l.bf16 %v1280
        %v1289 = vstv %s1272
        %v1290 = vmul.f32 %v1289, %v1281
        %v1291 = vmul.f32 %v1289, %v1282
        %v1292 = vmul.f32 %v1289, %v1283
        %v1293 = vmul.f32 %v1289, %v1284
        %v1294 = vmul.f32 %v1289, %v1285
        %v1295 = vmul.f32 %v1289, %v1286
        %v1296 = vmul.f32 %v1289, %v1287
        %v1297 = vmul.f32 %v1289, %v1288
        %v1298 = vadd.f32 %v1264, %v1290
        %v1299 = vadd.f32 %v1265, %v1291
        %v1300 = vadd.f32 %v1266, %v1292
        %v1301 = vadd.f32 %v1267, %v1293
        %v1302 = vadd.f32 %v1268, %v1294
        %v1303 = vadd.f32 %v1269, %v1295
        %v1304 = vadd.f32 %v1270, %v1296
        %v1305 = vadd.f32 %v1271, %v1297
        %s1306 = sld [smem:[#allocation3 + $0x82]]
        %v1307 = vld [vmem:[%s892] sm:$0xf]
        %v1308 = vld [vmem:[%s892 + $0x4] sm:$0xf]
        %v1309 = vld [vmem:[%s892 + $0x8] sm:$0xf]
        %v1310 = vld [vmem:[%s892 + $0xc] sm:$0xf]
        %v1311 = vld [vmem:[%s892 + $0x10] sm:$0xf]
        %v1312 = vld [vmem:[%s892 + $0x14] sm:$0xf]
        %v1313 = vld [vmem:[%s892 + $0x18] sm:$0xf]
        %v1314 = vld [vmem:[%s892 + $0x1c] sm:$0xf]
        %v1315 = vunpack.c.l.bf16 %v1307
        %v1316 = vunpack.c.l.bf16 %v1308
        %v1317 = vunpack.c.l.bf16 %v1309
        %v1318 = vunpack.c.l.bf16 %v1310
        %v1319 = vunpack.c.l.bf16 %v1311
        %v1320 = vunpack.c.l.bf16 %v1312
        %v1321 = vunpack.c.l.bf16 %v1313
        %v1322 = vunpack.c.l.bf16 %v1314
        %v1323 = vstv %s1306
        %v1324 = vmul.f32 %v1323, %v1315
        %v1325 = vmul.f32 %v1323, %v1316
        %v1326 = vmul.f32 %v1323, %v1317
        %v1327 = vmul.f32 %v1323, %v1318
        %v1328 = vmul.f32 %v1323, %v1319
        %v1329 = vmul.f32 %v1323, %v1320
        %v1330 = vmul.f32 %v1323, %v1321
        %v1331 = vmul.f32 %v1323, %v1322
        %v1332 = vadd.f32 %v1298, %v1324
        %v1333 = vadd.f32 %v1299, %v1325
        %v1334 = vadd.f32 %v1300, %v1326
        %v1335 = vadd.f32 %v1301, %v1327
        %v1336 = vadd.f32 %v1302, %v1328
        %v1337 = vadd.f32 %v1303, %v1329
        %v1338 = vadd.f32 %v1304, %v1330
        %v1339 = vadd.f32 %v1305, %v1331
        %s1340 = sld [smem:[#allocation3 + $0x83]]
        %v1341 = vld [vmem:[%s450] sm:$0xf]
        %v1342 = vld [vmem:[%s450 + $0x4] sm:$0xf]
        %v1343 = vld [vmem:[%s450 + $0x8] sm:$0xf]
        %v1344 = vld [vmem:[%s450 + $0xc] sm:$0xf]
        %v1345 = vld [vmem:[%s450 + $0x10] sm:$0xf]
        %v1346 = vld [vmem:[%s450 + $0x14] sm:$0xf]
        %v1347 = vld [vmem:[%s450 + $0x18] sm:$0xf]
        %v1348 = vld [vmem:[%s450 + $0x1c] sm:$0xf]
        %v1349 = vunpack.c.l.bf16 %v1341
        %v1350 = vunpack.c.l.bf16 %v1342
        %v1351 = vunpack.c.l.bf16 %v1343
        %v1352 = vunpack.c.l.bf16 %v1344
        %v1353 = vunpack.c.l.bf16 %v1345
        %v1354 = vunpack.c.l.bf16 %v1346
        %v1355 = vunpack.c.l.bf16 %v1347
        %v1356 = vunpack.c.l.bf16 %v1348
        %v1357 = vstv %s1340
        %v1358 = vmul.f32 %v1357, %v1349
        %v1359 = vmul.f32 %v1357, %v1350
        %v1360 = vmul.f32 %v1357, %v1351
        %v1361 = vmul.f32 %v1357, %v1352
        %v1362 = vmul.f32 %v1357, %v1353
        %v1363 = vmul.f32 %v1357, %v1354
        %v1364 = vmul.f32 %v1357, %v1355
        %v1365 = vmul.f32 %v1357, %v1356
        %v1366 = vadd.f32 %v1332, %v1358
        %v1367 = vadd.f32 %v1333, %v1359
        %v1368 = vadd.f32 %v1334, %v1360
        %v1369 = vadd.f32 %v1335, %v1361
        %v1370 = vadd.f32 %v1336, %v1362
        %v1371 = vadd.f32 %v1337, %v1363
        %v1372 = vadd.f32 %v1338, %v1364
        %v1373 = vadd.f32 %v1339, %v1365
        %s1374 = sld [smem:[#allocation3 + $0x84]]
        %v1375 = vld [vmem:[%s961] sm:$0xf]
        %v1376 = vld [vmem:[%s961 + $0x4] sm:$0xf]
        %v1377 = vld [vmem:[%s961 + $0x8] sm:$0xf]
        %v1378 = vld [vmem:[%s961 + $0xc] sm:$0xf]
        %v1379 = vld [vmem:[%s961 + $0x10] sm:$0xf]
        %v1380 = vld [vmem:[%s961 + $0x14] sm:$0xf]
        %v1381 = vld [vmem:[%s961 + $0x18] sm:$0xf]
        %v1382 = vld [vmem:[%s961 + $0x1c] sm:$0xf]
        %v1383 = vunpack.c.l.bf16 %v1375
        %v1384 = vunpack.c.l.bf16 %v1376
        %v1385 = vunpack.c.l.bf16 %v1377
        %v1386 = vunpack.c.l.bf16 %v1378
        %v1387 = vunpack.c.l.bf16 %v1379
        %v1388 = vunpack.c.l.bf16 %v1380
        %v1389 = vunpack.c.l.bf16 %v1381
        %v1390 = vunpack.c.l.bf16 %v1382
        %v1391 = vstv %s1374
        %v1392 = vmul.f32 %v1391, %v1383
        %v1393 = vmul.f32 %v1391, %v1384
        %v1394 = vmul.f32 %v1391, %v1385
        %v1395 = vmul.f32 %v1391, %v1386
        %v1396 = vmul.f32 %v1391, %v1387
        %v1397 = vmul.f32 %v1391, %v1388
        %v1398 = vmul.f32 %v1391, %v1389
        %v1399 = vmul.f32 %v1391, %v1390
        %v1400 = vadd.f32 %v1366, %v1392
        %v1401 = vadd.f32 %v1367, %v1393
        %v1402 = vadd.f32 %v1368, %v1394
        %v1403 = vadd.f32 %v1369, %v1395
        %v1404 = vadd.f32 %v1370, %v1396
        %v1405 = vadd.f32 %v1371, %v1397
        %v1406 = vadd.f32 %v1372, %v1398
        %v1407 = vadd.f32 %v1373, %v1399
        %s1408 = sld [smem:[#allocation3 + $0x85]]
        %v1409 = vld [vmem:[%s996] sm:$0xf]
        %v1410 = vld [vmem:[%s996 + $0x4] sm:$0xf]
        %v1411 = vld [vmem:[%s996 + $0x8] sm:$0xf]
        %v1412 = vld [vmem:[%s996 + $0xc] sm:$0xf]
        %v1413 = vld [vmem:[%s996 + $0x10] sm:$0xf]
        %v1414 = vld [vmem:[%s996 + $0x14] sm:$0xf]
        %v1415 = vld [vmem:[%s996 + $0x18] sm:$0xf]
        %v1416 = vld [vmem:[%s996 + $0x1c] sm:$0xf]
        %v1417 = vunpack.c.l.bf16 %v1409
        %v1418 = vunpack.c.l.bf16 %v1410
        %v1419 = vunpack.c.l.bf16 %v1411
        %v1420 = vunpack.c.l.bf16 %v1412
        %v1421 = vunpack.c.l.bf16 %v1413
        %v1422 = vunpack.c.l.bf16 %v1414
        %v1423 = vunpack.c.l.bf16 %v1415
        %v1424 = vunpack.c.l.bf16 %v1416
        %v1425 = vstv %s1408
        %v1426 = vmul.f32 %v1425, %v1417
        %v1427 = vmul.f32 %v1425, %v1418
        %v1428 = vmul.f32 %v1425, %v1419
        %v1429 = vmul.f32 %v1425, %v1420
        %v1430 = vmul.f32 %v1425, %v1421
        %v1431 = vmul.f32 %v1425, %v1422
        %v1432 = vmul.f32 %v1425, %v1423
        %v1433 = vmul.f32 %v1425, %v1424
        %v1434 = vadd.f32 %v1400, %v1426
        %v1435 = vadd.f32 %v1401, %v1427
        %v1436 = vadd.f32 %v1402, %v1428
        %v1437 = vadd.f32 %v1403, %v1429
        %v1438 = vadd.f32 %v1404, %v1430
        %v1439 = vadd.f32 %v1405, %v1431
        %v1440 = vadd.f32 %v1406, %v1432
        %v1441 = vadd.f32 %v1407, %v1433
        %s1442 = sld [smem:[#allocation3 + $0x86]]
        %v1443 = vld [vmem:[%s460] sm:$0xf]
        %v1444 = vld [vmem:[%s460 + $0x4] sm:$0xf]
        %v1445 = vld [vmem:[%s460 + $0x8] sm:$0xf]
        %v1446 = vld [vmem:[%s460 + $0xc] sm:$0xf]
        %v1447 = vld [vmem:[%s460 + $0x10] sm:$0xf]
        %v1448 = vld [vmem:[%s460 + $0x14] sm:$0xf]
        %v1449 = vld [vmem:[%s460 + $0x18] sm:$0xf]
        %v1450 = vld [vmem:[%s460 + $0x1c] sm:$0xf]
        %v1451 = vunpack.c.l.bf16 %v1443
        %v1452 = vunpack.c.l.bf16 %v1444
        %v1453 = vunpack.c.l.bf16 %v1445
        %v1454 = vunpack.c.l.bf16 %v1446
        %v1455 = vunpack.c.l.bf16 %v1447
        %v1456 = vunpack.c.l.bf16 %v1448
        %v1457 = vunpack.c.l.bf16 %v1449
        %v1458 = vunpack.c.l.bf16 %v1450
        %v1459 = vstv %s1442
        %v1460 = vmul.f32 %v1459, %v1451
        %v1461 = vmul.f32 %v1459, %v1452
        %v1462 = vmul.f32 %v1459, %v1453
        %v1463 = vmul.f32 %v1459, %v1454
        %v1464 = vmul.f32 %v1459, %v1455
        %v1465 = vmul.f32 %v1459, %v1456
        %v1466 = vmul.f32 %v1459, %v1457
        %v1467 = vmul.f32 %v1459, %v1458
        %v1468 = vadd.f32 %v1434, %v1460
        %v1469 = vadd.f32 %v1435, %v1461
        %v1470 = vadd.f32 %v1436, %v1462
        %v1471 = vadd.f32 %v1437, %v1463
        %v1472 = vadd.f32 %v1438, %v1464
        %v1473 = vadd.f32 %v1439, %v1465
        %v1474 = vadd.f32 %v1440, %v1466
        %v1475 = vadd.f32 %v1441, %v1467
        %s1476 = sld [smem:[#allocation3 + $0x87]]
        %v1477 = vld [vmem:[%s1065] sm:$0xf]
        %v1478 = vld [vmem:[%s1065 + $0x4] sm:$0xf]
        %v1479 = vld [vmem:[%s1065 + $0x8] sm:$0xf]
        %v1480 = vld [vmem:[%s1065 + $0xc] sm:$0xf]
        %v1481 = vld [vmem:[%s1065 + $0x10] sm:$0xf]
        %v1482 = vld [vmem:[%s1065 + $0x14] sm:$0xf]
        %v1483 = vld [vmem:[%s1065 + $0x18] sm:$0xf]
        %v1484 = vld [vmem:[%s1065 + $0x1c] sm:$0xf]
        %v1485 = vunpack.c.l.bf16 %v1477
        %v1486 = vunpack.c.l.bf16 %v1478
        %v1487 = vunpack.c.l.bf16 %v1479
        %v1488 = vunpack.c.l.bf16 %v1480
        %v1489 = vunpack.c.l.bf16 %v1481
        %v1490 = vunpack.c.l.bf16 %v1482
        %v1491 = vunpack.c.l.bf16 %v1483
        %v1492 = vunpack.c.l.bf16 %v1484
        %v1493 = vstv %s1476
        %v1494 = vmul.f32 %v1493, %v1485
        %v1495 = vmul.f32 %v1493, %v1486
        %v1496 = vmul.f32 %v1493, %v1487
        %v1497 = vmul.f32 %v1493, %v1488
        %v1498 = vmul.f32 %v1493, %v1489
        %v1499 = vmul.f32 %v1493, %v1490
        %v1500 = vmul.f32 %v1493, %v1491
        %v1501 = vmul.f32 %v1493, %v1492
        %v1502 = vadd.f32 %v1468, %v1494
        %v1503 = vadd.f32 %v1469, %v1495
        %v1504 = vadd.f32 %v1470, %v1496
        %v1505 = vadd.f32 %v1471, %v1497
        %v1506 = vadd.f32 %v1472, %v1498
        %v1507 = vadd.f32 %v1473, %v1499
        %v1508 = vadd.f32 %v1474, %v1500
        %v1509 = vadd.f32 %v1475, %v1501
        %s1510 = sld [smem:[#allocation3 + $0x88]]
        %v1511 = vld [vmem:[%s1100] sm:$0xf]
        %v1512 = vld [vmem:[%s1100 + $0x4] sm:$0xf]
        %v1513 = vld [vmem:[%s1100 + $0x8] sm:$0xf]
        %v1514 = vld [vmem:[%s1100 + $0xc] sm:$0xf]
        %v1515 = vld [vmem:[%s1100 + $0x10] sm:$0xf]
        %v1516 = vld [vmem:[%s1100 + $0x14] sm:$0xf]
        %v1517 = vld [vmem:[%s1100 + $0x18] sm:$0xf]
        %v1518 = vld [vmem:[%s1100 + $0x1c] sm:$0xf]
        %v1519 = vunpack.c.l.bf16 %v1511
        %v1520 = vunpack.c.l.bf16 %v1512
        %v1521 = vunpack.c.l.bf16 %v1513
        %v1522 = vunpack.c.l.bf16 %v1514
        %v1523 = vunpack.c.l.bf16 %v1515
        %v1524 = vunpack.c.l.bf16 %v1516
        %v1525 = vunpack.c.l.bf16 %v1517
        %v1526 = vunpack.c.l.bf16 %v1518
        %v1527 = vstv %s1510
        %v1528 = vmul.f32 %v1527, %v1519
        %v1529 = vmul.f32 %v1527, %v1520
        %v1530 = vmul.f32 %v1527, %v1521
        %v1531 = vmul.f32 %v1527, %v1522
        %v1532 = vmul.f32 %v1527, %v1523
        %v1533 = vmul.f32 %v1527, %v1524
        %v1534 = vmul.f32 %v1527, %v1525
        %v1535 = vmul.f32 %v1527, %v1526
        %v1536 = vadd.f32 %v1502, %v1528
        %v1537 = vadd.f32 %v1503, %v1529
        %v1538 = vadd.f32 %v1504, %v1530
        %v1539 = vadd.f32 %v1505, %v1531
        %v1540 = vadd.f32 %v1506, %v1532
        %v1541 = vadd.f32 %v1507, %v1533
        %v1542 = vadd.f32 %v1508, %v1534
        %v1543 = vadd.f32 %v1509, %v1535
        %s1544 = sld [smem:[#allocation7 + $0x1]]
        %v1545 = vstv %s1544
        %v1546 = vadd.f32 %v1536, %v1545
        %v1547 = vadd.f32 %v1537, %v1545
        %v1548 = vadd.f32 %v1538, %v1545
        %v1549 = vadd.f32 %v1539, %v1545
        %v1550 = vadd.f32 %v1540, %v1545
        %v1551 = vadd.f32 %v1541, %v1545
        %v1552 = vadd.f32 %v1542, %v1545
        %v1553 = vadd.f32 %v1543, %v1545
        %v1554 = vmul.f32 %v1546, 0.1
        %v1555 = vmul.f32 %v1547, 0.1
        %v1556 = vmul.f32 %v1548, 0.1
        %v1557 = vmul.f32 %v1549, 0.1
        %v1558 = vmul.f32 %v1550, 0.1
        %v1559 = vmul.f32 %v1551, 0.1
        %v1560 = vmul.f32 %v1552, 0.1
        %v1561 = vmul.f32 %v1553, 0.1
        %v1562 = vmax.f32 %v1546, %v1554
        %v1563 = vmax.f32 %v1547, %v1555
        %v1564 = vmax.f32 %v1548, %v1556
        %v1565 = vmax.f32 %v1549, %v1557
        %v1566 = vmax.f32 %v1550, %v1558
        %v1567 = vmax.f32 %v1551, %v1559
        %v1568 = vmax.f32 %v1552, %v1560
        %v1569 = vmax.f32 %v1553, %v1561
        %v1570 = vadd.f32 %v1562, %v1227
        %v1571 = vadd.f32 %v1563, %v1229
        %v1572 = vadd.f32 %v1564, %v1232
        %v1573 = vadd.f32 %v1565, %v1234
        %v1574 = vadd.f32 %v1566, %v1237
        %v1575 = vadd.f32 %v1567, %v1239
        %v1576 = vadd.f32 %v1568, %v1242
        %v1577 = vadd.f32 %v1569, %v1244
        %s1578 = scalar_lea.vmem %s519, 64 [#allocation15]
        %1579 = vst [vmem:[%s1578] sm:$0xff] %v1570
        %1580 = vst [vmem:[%s1578 + $0x8] sm:$0xff] %v1571
        %1581 = vst [vmem:[%s1578 + $0x10] sm:$0xff] %v1572
        %1582 = vst [vmem:[%s1578 + $0x18] sm:$0xff] %v1573
        %1583 = vst [vmem:[%s1578 + $0x20] sm:$0xff] %v1574
        %1584 = vst [vmem:[%s1578 + $0x28] sm:$0xff] %v1575
        %1585 = vst [vmem:[%s1578 + $0x30] sm:$0xff] %v1576
        %1586 = vst [vmem:[%s1578 + $0x38] sm:$0xff] %v1577
        %s1587 = scalar_lea.vmem [#allocation2], 64
        %v1588 = vld [vmem:[%s1587] sm:$0xf]
        %v1589 = vld [vmem:[%s1587 + $0x4] sm:$0xf]
        %v1590 = vld [vmem:[%s1587 + $0x8] sm:$0xf]
        %v1591 = vld [vmem:[%s1587 + $0xc] sm:$0xf]
        %v1592 = vld [vmem:[%s1587 + $0x10] sm:$0xf]
        %v1593 = vld [vmem:[%s1587 + $0x14] sm:$0xf]
        %v1594 = vld [vmem:[%s1587 + $0x18] sm:$0xf]
        %v1595 = vld [vmem:[%s1587 + $0x1c] sm:$0xf]
        %v1604 = vunpack.c.l.b16 %v1588
        %v1605 = vunpack.c.l.b16 %v1589
        %v1606 = vunpack.c.l.b16 %v1590
        %v1607 = vunpack.c.l.b16 %v1591
        %v1608 = vunpack.c.l.b16 %v1592
        %v1609 = vunpack.c.l.b16 %v1593
        %v1610 = vunpack.c.l.b16 %v1594
        %v1611 = vunpack.c.l.b16 %v1595
        %v1612 = vpack.c.b16 %v1605, %v1604
        %v1613 = vpack.c.b16 %v1607, %v1606
        %v1614 = vpack.c.b16 %v1609, %v1608
        %v1615 = vpack.c.b16 %v1611, %v1610
        %v1617 = vsel %vm788, %v1612, 0
        %v1620 = vsel %vm788, %v1613, 0
        %v1623 = vsel %vm788, %v1614, 0
        %v1626 = vsel %vm788, %v1615, 0
        %1628 = vmatpush.bf16.msra.mxu0 0
        %1629 = vmatpush.bf16.msra.mxu0 0
        %1630 = vmatpush.bf16.msra.mxu0 0
        %1631 = vmatpush.bf16.msra.mxu0 0
        %1632 = vmatpush.bf16.msra.mxu0 0
        %1633 = vmatpush.bf16.msra.mxu0 0
        %1634 = vmatpush.bf16.msra.mxu0 %v785
        %1635 = vmatpush.bf16.msra.mxu0 %v784
        %1636 = vmatmul.bf16.gmra.mxu0 %v1617
        %v1637 = vpop.f32.mrf.mxu0
        %v1638 = vadd.f32 0.0, %v1637
        %v1639 = vpop.f32.mrf.mxu0
        %v1640 = vadd.f32 0.0, %v1639
        %1641 = vmatmul.bf16.gmra.mxu0 %v1620
        %v1642 = vpop.f32.mrf.mxu0
        %v1643 = vadd.f32 0.0, %v1642
        %v1644 = vpop.f32.mrf.mxu0
        %v1645 = vadd.f32 0.0, %v1644
        %1646 = vmatmul.bf16.gmra.mxu0 %v1623
        %v1647 = vpop.f32.mrf.mxu0
        %v1648 = vadd.f32 0.0, %v1647
        %v1649 = vpop.f32.mrf.mxu0
        %v1650 = vadd.f32 0.0, %v1649
        %1651 = vmatmul.bf16.gmra.mxu0 %v1626
        %v1652 = vpop.f32.mrf.mxu0
        %v1653 = vadd.f32 0.0, %v1652
        %v1654 = vpop.f32.mrf.mxu0
        %v1655 = vadd.f32 0.0, %v1654
        %1656 = vdwg.mxu0
        %s1657 = sld [smem:[#allocation3 + $0x100]]
        %v1658 = vld [vmem:[%s440] sm:$0xf]
        %v1659 = vld [vmem:[%s440 + $0x4] sm:$0xf]
        %v1660 = vld [vmem:[%s440 + $0x8] sm:$0xf]
        %v1661 = vld [vmem:[%s440 + $0xc] sm:$0xf]
        %v1662 = vld [vmem:[%s440 + $0x10] sm:$0xf]
        %v1663 = vld [vmem:[%s440 + $0x14] sm:$0xf]
        %v1664 = vld [vmem:[%s440 + $0x18] sm:$0xf]
        %v1665 = vld [vmem:[%s440 + $0x1c] sm:$0xf]
        %v1666 = vunpack.c.l.bf16 %v1658
        %v1667 = vunpack.c.l.bf16 %v1659
        %v1668 = vunpack.c.l.bf16 %v1660
        %v1669 = vunpack.c.l.bf16 %v1661
        %v1670 = vunpack.c.l.bf16 %v1662
        %v1671 = vunpack.c.l.bf16 %v1663
        %v1672 = vunpack.c.l.bf16 %v1664
        %v1673 = vunpack.c.l.bf16 %v1665
        %v1674 = vstv %s1657
        %v1675 = vmul.f32 %v1674, %v1666
        %v1676 = vmul.f32 %v1674, %v1667
        %v1677 = vmul.f32 %v1674, %v1668
        %v1678 = vmul.f32 %v1674, %v1669
        %v1679 = vmul.f32 %v1674, %v1670
        %v1680 = vmul.f32 %v1674, %v1671
        %v1681 = vmul.f32 %v1674, %v1672
        %v1682 = vmul.f32 %v1674, %v1673
        %s1683 = sld [smem:[#allocation3 + $0x101]]
        %v1684 = vld [vmem:[%s857] sm:$0xf]
        %v1685 = vld [vmem:[%s857 + $0x4] sm:$0xf]
        %v1686 = vld [vmem:[%s857 + $0x8] sm:$0xf]
        %v1687 = vld [vmem:[%s857 + $0xc] sm:$0xf]
        %v1688 = vld [vmem:[%s857 + $0x10] sm:$0xf]
        %v1689 = vld [vmem:[%s857 + $0x14] sm:$0xf]
        %v1690 = vld [vmem:[%s857 + $0x18] sm:$0xf]
        %v1691 = vld [vmem:[%s857 + $0x1c] sm:$0xf]
        %v1692 = vunpack.c.l.bf16 %v1684
        %v1693 = vunpack.c.l.bf16 %v1685
        %v1694 = vunpack.c.l.bf16 %v1686
        %v1695 = vunpack.c.l.bf16 %v1687
        %v1696 = vunpack.c.l.bf16 %v1688
        %v1697 = vunpack.c.l.bf16 %v1689
        %v1698 = vunpack.c.l.bf16 %v1690
        %v1699 = vunpack.c.l.bf16 %v1691
        %v1700 = vstv %s1683
        %v1701 = vmul.f32 %v1700, %v1692
        %v1702 = vmul.f32 %v1700, %v1693
        %v1703 = vmul.f32 %v1700, %v1694
        %v1704 = vmul.f32 %v1700, %v1695
        %v1705 = vmul.f32 %v1700, %v1696
        %v1706 = vmul.f32 %v1700, %v1697
        %v1707 = vmul.f32 %v1700, %v1698
        %v1708 = vmul.f32 %v1700, %v1699
        %v1709 = vadd.f32 %v1675, %v1701
        %v1710 = vadd.f32 %v1676, %v1702
        %v1711 = vadd.f32 %v1677, %v1703
        %v1712 = vadd.f32 %v1678, %v1704
        %v1713 = vadd.f32 %v1679, %v1705
        %v1714 = vadd.f32 %v1680, %v1706
        %v1715 = vadd.f32 %v1681, %v1707
        %v1716 = vadd.f32 %v1682, %v1708
        %s1717 = sld [smem:[#allocation3 + $0x102]]
        %v1718 = vld [vmem:[%s892] sm:$0xf]
        %v1719 = vld [vmem:[%s892 + $0x4] sm:$0xf]
        %v1720 = vld [vmem:[%s892 + $0x8] sm:$0xf]
        %v1721 = vld [vmem:[%s892 + $0xc] sm:$0xf]
        %v1722 = vld [vmem:[%s892 + $0x10] sm:$0xf]
        %v1723 = vld [vmem:[%s892 + $0x14] sm:$0xf]
        %v1724 = vld [vmem:[%s892 + $0x18] sm:$0xf]
        %v1725 = vld [vmem:[%s892 + $0x1c] sm:$0xf]
        %v1726 = vunpack.c.l.bf16 %v1718
        %v1727 = vunpack.c.l.bf16 %v1719
        %v1728 = vunpack.c.l.bf16 %v1720
        %v1729 = vunpack.c.l.bf16 %v1721
        %v1730 = vunpack.c.l.bf16 %v1722
        %v1731 = vunpack.c.l.bf16 %v1723
        %v1732 = vunpack.c.l.bf16 %v1724
        %v1733 = vunpack.c.l.bf16 %v1725
        %v1734 = vstv %s1717
        %v1735 = vmul.f32 %v1734, %v1726
        %v1736 = vmul.f32 %v1734, %v1727
        %v1737 = vmul.f32 %v1734, %v1728
        %v1738 = vmul.f32 %v1734, %v1729
        %v1739 = vmul.f32 %v1734, %v1730
        %v1740 = vmul.f32 %v1734, %v1731
        %v1741 = vmul.f32 %v1734, %v1732
        %v1742 = vmul.f32 %v1734, %v1733
        %v1743 = vadd.f32 %v1709, %v1735
        %v1744 = vadd.f32 %v1710, %v1736
        %v1745 = vadd.f32 %v1711, %v1737
        %v1746 = vadd.f32 %v1712, %v1738
        %v1747 = vadd.f32 %v1713, %v1739
        %v1748 = vadd.f32 %v1714, %v1740
        %v1749 = vadd.f32 %v1715, %v1741
        %v1750 = vadd.f32 %v1716, %v1742
        %s1751 = sld [smem:[#allocation3 + $0x103]]
        %v1752 = vld [vmem:[%s450] sm:$0xf]
        %v1753 = vld [vmem:[%s450 + $0x4] sm:$0xf]
        %v1754 = vld [vmem:[%s450 + $0x8] sm:$0xf]
        %v1755 = vld [vmem:[%s450 + $0xc] sm:$0xf]
        %v1756 = vld [vmem:[%s450 + $0x10] sm:$0xf]
        %v1757 = vld [vmem:[%s450 + $0x14] sm:$0xf]
        %v1758 = vld [vmem:[%s450 + $0x18] sm:$0xf]
        %v1759 = vld [vmem:[%s450 + $0x1c] sm:$0xf]
        %v1760 = vunpack.c.l.bf16 %v1752
        %v1761 = vunpack.c.l.bf16 %v1753
        %v1762 = vunpack.c.l.bf16 %v1754
        %v1763 = vunpack.c.l.bf16 %v1755
        %v1764 = vunpack.c.l.bf16 %v1756
        %v1765 = vunpack.c.l.bf16 %v1757
        %v1766 = vunpack.c.l.bf16 %v1758
        %v1767 = vunpack.c.l.bf16 %v1759
        %v1768 = vstv %s1751
        %v1769 = vmul.f32 %v1768, %v1760
        %v1770 = vmul.f32 %v1768, %v1761
        %v1771 = vmul.f32 %v1768, %v1762
        %v1772 = vmul.f32 %v1768, %v1763
        %v1773 = vmul.f32 %v1768, %v1764
        %v1774 = vmul.f32 %v1768, %v1765
        %v1775 = vmul.f32 %v1768, %v1766
        %v1776 = vmul.f32 %v1768, %v1767
        %v1777 = vadd.f32 %v1743, %v1769
        %v1778 = vadd.f32 %v1744, %v1770
        %v1779 = vadd.f32 %v1745, %v1771
        %v1780 = vadd.f32 %v1746, %v1772
        %v1781 = vadd.f32 %v1747, %v1773
        %v1782 = vadd.f32 %v1748, %v1774
        %v1783 = vadd.f32 %v1749, %v1775
        %v1784 = vadd.f32 %v1750, %v1776
        %s1785 = sld [smem:[#allocation3 + $0x104]]
        %v1786 = vld [vmem:[%s961] sm:$0xf]
        %v1787 = vld [vmem:[%s961 + $0x4] sm:$0xf]
        %v1788 = vld [vmem:[%s961 + $0x8] sm:$0xf]
        %v1789 = vld [vmem:[%s961 + $0xc] sm:$0xf]
        %v1790 = vld [vmem:[%s961 + $0x10] sm:$0xf]
        %v1791 = vld [vmem:[%s961 + $0x14] sm:$0xf]
        %v1792 = vld [vmem:[%s961 + $0x18] sm:$0xf]
        %v1793 = vld [vmem:[%s961 + $0x1c] sm:$0xf]
        %v1794 = vunpack.c.l.bf16 %v1786
        %v1795 = vunpack.c.l.bf16 %v1787
        %v1796 = vunpack.c.l.bf16 %v1788
        %v1797 = vunpack.c.l.bf16 %v1789
        %v1798 = vunpack.c.l.bf16 %v1790
        %v1799 = vunpack.c.l.bf16 %v1791
        %v1800 = vunpack.c.l.bf16 %v1792
        %v1801 = vunpack.c.l.bf16 %v1793
        %v1802 = vstv %s1785
        %v1803 = vmul.f32 %v1802, %v1794
        %v1804 = vmul.f32 %v1802, %v1795
        %v1805 = vmul.f32 %v1802, %v1796
        %v1806 = vmul.f32 %v1802, %v1797
        %v1807 = vmul.f32 %v1802, %v1798
        %v1808 = vmul.f32 %v1802, %v1799
        %v1809 = vmul.f32 %v1802, %v1800
        %v1810 = vmul.f32 %v1802, %v1801
        %v1811 = vadd.f32 %v1777, %v1803
        %v1812 = vadd.f32 %v1778, %v1804
        %v1813 = vadd.f32 %v1779, %v1805
        %v1814 = vadd.f32 %v1780, %v1806
        %v1815 = vadd.f32 %v1781, %v1807
        %v1816 = vadd.f32 %v1782, %v1808
        %v1817 = vadd.f32 %v1783, %v1809
        %v1818 = vadd.f32 %v1784, %v1810
        %s1819 = sld [smem:[#allocation3 + $0x105]]
        %v1820 = vld [vmem:[%s996] sm:$0xf]
        %v1821 = vld [vmem:[%s996 + $0x4] sm:$0xf]
        %v1822 = vld [vmem:[%s996 + $0x8] sm:$0xf]
        %v1823 = vld [vmem:[%s996 + $0xc] sm:$0xf]
        %v1824 = vld [vmem:[%s996 + $0x10] sm:$0xf]
        %v1825 = vld [vmem:[%s996 + $0x14] sm:$0xf]
        %v1826 = vld [vmem:[%s996 + $0x18] sm:$0xf]
        %v1827 = vld [vmem:[%s996 + $0x1c] sm:$0xf]
        %v1828 = vunpack.c.l.bf16 %v1820
        %v1829 = vunpack.c.l.bf16 %v1821
        %v1830 = vunpack.c.l.bf16 %v1822
        %v1831 = vunpack.c.l.bf16 %v1823
        %v1832 = vunpack.c.l.bf16 %v1824
        %v1833 = vunpack.c.l.bf16 %v1825
        %v1834 = vunpack.c.l.bf16 %v1826
        %v1835 = vunpack.c.l.bf16 %v1827
        %v1836 = vstv %s1819
        %v1837 = vmul.f32 %v1836, %v1828
        %v1838 = vmul.f32 %v1836, %v1829
        %v1839 = vmul.f32 %v1836, %v1830
        %v1840 = vmul.f32 %v1836, %v1831
        %v1841 = vmul.f32 %v1836, %v1832
        %v1842 = vmul.f32 %v1836, %v1833
        %v1843 = vmul.f32 %v1836, %v1834
        %v1844 = vmul.f32 %v1836, %v1835
        %v1845 = vadd.f32 %v1811, %v1837
        %v1846 = vadd.f32 %v1812, %v1838
        %v1847 = vadd.f32 %v1813, %v1839
        %v1848 = vadd.f32 %v1814, %v1840
        %v1849 = vadd.f32 %v1815, %v1841
        %v1850 = vadd.f32 %v1816, %v1842
        %v1851 = vadd.f32 %v1817, %v1843
        %v1852 = vadd.f32 %v1818, %v1844
        %s1853 = sld [smem:[#allocation3 + $0x106]]
        %v1854 = vld [vmem:[%s460] sm:$0xf]
        %v1855 = vld [vmem:[%s460 + $0x4] sm:$0xf]
        %v1856 = vld [vmem:[%s460 + $0x8] sm:$0xf]
        %v1857 = vld [vmem:[%s460 + $0xc] sm:$0xf]
        %v1858 = vld [vmem:[%s460 + $0x10] sm:$0xf]
        %v1859 = vld [vmem:[%s460 + $0x14] sm:$0xf]
        %v1860 = vld [vmem:[%s460 + $0x18] sm:$0xf]
        %v1861 = vld [vmem:[%s460 + $0x1c] sm:$0xf]
        %v1862 = vunpack.c.l.bf16 %v1854
        %v1863 = vunpack.c.l.bf16 %v1855
        %v1864 = vunpack.c.l.bf16 %v1856
        %v1865 = vunpack.c.l.bf16 %v1857
        %v1866 = vunpack.c.l.bf16 %v1858
        %v1867 = vunpack.c.l.bf16 %v1859
        %v1868 = vunpack.c.l.bf16 %v1860
        %v1869 = vunpack.c.l.bf16 %v1861
        %v1870 = vstv %s1853
        %v1871 = vmul.f32 %v1870, %v1862
        %v1872 = vmul.f32 %v1870, %v1863
        %v1873 = vmul.f32 %v1870, %v1864
        %v1874 = vmul.f32 %v1870, %v1865
        %v1875 = vmul.f32 %v1870, %v1866
        %v1876 = vmul.f32 %v1870, %v1867
        %v1877 = vmul.f32 %v1870, %v1868
        %v1878 = vmul.f32 %v1870, %v1869
        %v1879 = vadd.f32 %v1845, %v1871
        %v1880 = vadd.f32 %v1846, %v1872
        %v1881 = vadd.f32 %v1847, %v1873
        %v1882 = vadd.f32 %v1848, %v1874
        %v1883 = vadd.f32 %v1849, %v1875
        %v1884 = vadd.f32 %v1850, %v1876
        %v1885 = vadd.f32 %v1851, %v1877
        %v1886 = vadd.f32 %v1852, %v1878
        %s1887 = sld [smem:[#allocation3 + $0x107]]
        %v1888 = vld [vmem:[%s1065] sm:$0xf]
        %v1889 = vld [vmem:[%s1065 + $0x4] sm:$0xf]
        %v1890 = vld [vmem:[%s1065 + $0x8] sm:$0xf]
        %v1891 = vld [vmem:[%s1065 + $0xc] sm:$0xf]
        %v1892 = vld [vmem:[%s1065 + $0x10] sm:$0xf]
        %v1893 = vld [vmem:[%s1065 + $0x14] sm:$0xf]
        %v1894 = vld [vmem:[%s1065 + $0x18] sm:$0xf]
        %v1895 = vld [vmem:[%s1065 + $0x1c] sm:$0xf]
        %v1896 = vunpack.c.l.bf16 %v1888
        %v1897 = vunpack.c.l.bf16 %v1889
        %v1898 = vunpack.c.l.bf16 %v1890
        %v1899 = vunpack.c.l.bf16 %v1891
        %v1900 = vunpack.c.l.bf16 %v1892
        %v1901 = vunpack.c.l.bf16 %v1893
        %v1902 = vunpack.c.l.bf16 %v1894
        %v1903 = vunpack.c.l.bf16 %v1895
        %v1904 = vstv %s1887
        %v1905 = vmul.f32 %v1904, %v1896
        %v1906 = vmul.f32 %v1904, %v1897
        %v1907 = vmul.f32 %v1904, %v1898
        %v1908 = vmul.f32 %v1904, %v1899
        %v1909 = vmul.f32 %v1904, %v1900
        %v1910 = vmul.f32 %v1904, %v1901
        %v1911 = vmul.f32 %v1904, %v1902
        %v1912 = vmul.f32 %v1904, %v1903
        %v1913 = vadd.f32 %v1879, %v1905
        %v1914 = vadd.f32 %v1880, %v1906
        %v1915 = vadd.f32 %v1881, %v1907
        %v1916 = vadd.f32 %v1882, %v1908
        %v1917 = vadd.f32 %v1883, %v1909
        %v1918 = vadd.f32 %v1884, %v1910
        %v1919 = vadd.f32 %v1885, %v1911
        %v1920 = vadd.f32 %v1886, %v1912
        %s1921 = sld [smem:[#allocation3 + $0x108]]
        %v1922 = vld [vmem:[%s1100] sm:$0xf]
        %v1923 = vld [vmem:[%s1100 + $0x4] sm:$0xf]
        %v1924 = vld [vmem:[%s1100 + $0x8] sm:$0xf]
        %v1925 = vld [vmem:[%s1100 + $0xc] sm:$0xf]
        %v1926 = vld [vmem:[%s1100 + $0x10] sm:$0xf]
        %v1927 = vld [vmem:[%s1100 + $0x14] sm:$0xf]
        %v1928 = vld [vmem:[%s1100 + $0x18] sm:$0xf]
        %v1929 = vld [vmem:[%s1100 + $0x1c] sm:$0xf]
        %v1930 = vunpack.c.l.bf16 %v1922
        %v1931 = vunpack.c.l.bf16 %v1923
        %v1932 = vunpack.c.l.bf16 %v1924
        %v1933 = vunpack.c.l.bf16 %v1925
        %v1934 = vunpack.c.l.bf16 %v1926
        %v1935 = vunpack.c.l.bf16 %v1927
        %v1936 = vunpack.c.l.bf16 %v1928
        %v1937 = vunpack.c.l.bf16 %v1929
        %v1938 = vstv %s1921
        %v1939 = vmul.f32 %v1938, %v1930
        %v1940 = vmul.f32 %v1938, %v1931
        %v1941 = vmul.f32 %v1938, %v1932
        %v1942 = vmul.f32 %v1938, %v1933
        %v1943 = vmul.f32 %v1938, %v1934
        %v1944 = vmul.f32 %v1938, %v1935
        %v1945 = vmul.f32 %v1938, %v1936
        %v1946 = vmul.f32 %v1938, %v1937
        %v1947 = vadd.f32 %v1913, %v1939
        %v1948 = vadd.f32 %v1914, %v1940
        %v1949 = vadd.f32 %v1915, %v1941
        %v1950 = vadd.f32 %v1916, %v1942
        %v1951 = vadd.f32 %v1917, %v1943
        %v1952 = vadd.f32 %v1918, %v1944
        %v1953 = vadd.f32 %v1919, %v1945
        %v1954 = vadd.f32 %v1920, %v1946
        %s1955 = sld [smem:[#allocation7 + $0x2]]
        %v1956 = vstv %s1955
        %v1957 = vadd.f32 %v1947, %v1956
        %v1958 = vadd.f32 %v1948, %v1956
        %v1959 = vadd.f32 %v1949, %v1956
        %v1960 = vadd.f32 %v1950, %v1956
        %v1961 = vadd.f32 %v1951, %v1956
        %v1962 = vadd.f32 %v1952, %v1956
        %v1963 = vadd.f32 %v1953, %v1956
        %v1964 = vadd.f32 %v1954, %v1956
        %v1965 = vmul.f32 %v1957, 0.1
        %v1966 = vmul.f32 %v1958, 0.1
        %v1967 = vmul.f32 %v1959, 0.1
        %v1968 = vmul.f32 %v1960, 0.1
        %v1969 = vmul.f32 %v1961, 0.1
        %v1970 = vmul.f32 %v1962, 0.1
        %v1971 = vmul.f32 %v1963, 0.1
        %v1972 = vmul.f32 %v1964, 0.1
        %v1973 = vmax.f32 %v1957, %v1965
        %v1974 = vmax.f32 %v1958, %v1966
        %v1975 = vmax.f32 %v1959, %v1967
        %v1976 = vmax.f32 %v1960, %v1968
        %v1977 = vmax.f32 %v1961, %v1969
        %v1978 = vmax.f32 %v1962, %v1970
        %v1979 = vmax.f32 %v1963, %v1971
        %v1980 = vmax.f32 %v1964, %v1972
        %v1981 = vadd.f32 %v1973, %v1638
        %v1982 = vadd.f32 %v1974, %v1640
        %v1983 = vadd.f32 %v1975, %v1643
        %v1984 = vadd.f32 %v1976, %v1645
        %v1985 = vadd.f32 %v1977, %v1648
        %v1986 = vadd.f32 %v1978, %v1650
        %v1987 = vadd.f32 %v1979, %v1653
        %v1988 = vadd.f32 %v1980, %v1655
        %s1989 = scalar_lea.vmem %s519, 128 [#allocation15]
        %1990 = vst [vmem:[%s1989] sm:$0xff] %v1981
        %1991 = vst [vmem:[%s1989 + $0x8] sm:$0xff] %v1982
        %1992 = vst [vmem:[%s1989 + $0x10] sm:$0xff] %v1983
        %1993 = vst [vmem:[%s1989 + $0x18] sm:$0xff] %v1984
        %1994 = vst [vmem:[%s1989 + $0x20] sm:$0xff] %v1985
        %1995 = vst [vmem:[%s1989 + $0x28] sm:$0xff] %v1986
        %1996 = vst [vmem:[%s1989 + $0x30] sm:$0xff] %v1987
        %1997 = vst [vmem:[%s1989 + $0x38] sm:$0xff] %v1988
        %s1998 = sand.u32 %s264, 1
        %s1999 = scalar_lea.sflag [#allocation5], %s1998
        %s2000 = sand.u32 %s264, 1
        %s2001 = smul.addr %s2000, 192
        %s2002 = scalar_lea.vmem [#allocation15], %s2001
        // Predicated region
        $region81: #{tpu_custom_call.1} parent=51 // pred_check
          %p2003 = pneg %p274
        $region82: #{tpu_custom_call.1} parent=51 // pred_check_branch
          %2005 = sbr.rel (%p2003) target = $region84
        $region83: #{tpu_custom_call.1} parent=51 // pred_region
          %s2006 = smul.u32 8, %s39
          %2008 = vsyncadd %s1999, 0
          %s2009 = sadd.s32 %s40, %s2006
          %s2010 = smul.addr %s38, 24
          %s2011 = sadd.s32 %s2009, %s2010
          %s2012 = smul.addr %s2011, 8
          %s2013 = scalar_lea.hbm %s8, %s2012
          %s2014 = sshll.u32 %s2002, 4
          %s2015 = int_to_ptr.vmem [resolvable:$true] %s2014
          %s2016 = sshll.u32 %s2013, 4
          %s2017 = int_to_ptr.hbm [resolvable:$true] %s2016
          %2022 = dma.vmem_to_hbm [thread:$0]  %s2015, 3072, %s2017, %s1999, 128, 128, 8
        $region84: #{tpu_custom_call.1} parent=51 // pred_fallthru
          _
      $region52: #{tpu_custom_call.1} parent=5 // pred_fallthru
        _
      %p2023 = scmp.le.s32.totalorder 2, %s28
      // Predicated region
      $region85: #{tpu_custom_call.1} parent=5 // pred_check
        %p2024 = pneg %p2023
      $region86: #{tpu_custom_call.1} parent=5 // pred_check_branch
        %2026 = sbr.rel (%p2024) target = $region88
      $region87: #{tpu_custom_call.1} parent=5 // pred_region
        %s2027 = ssub.s32 %s28, 2
        // Predicated region
        $region89: #{tpu_custom_call.1} parent=87 // pred_check
          %p2028 = pneg %p280
        $region90: #{tpu_custom_call.1} parent=87 // pred_check_branch
          %2030 = sbr.rel (%p2028) target = $region92
        $region91: #{tpu_custom_call.1} parent=87 // pred_region
          %s2031 = sand.u32 %s265, 1
          %s2032 = scalar_lea.sflag [#allocation5], %s2031
          %s2033 = sand.u32 %s265, 1
          %s2034 = smul.addr %s2033, 192
          %s2035 = scalar_lea.vmem [#allocation15], %s2034
          %2037 = dma.done %s2032, 3072
        $region92: #{tpu_custom_call.1} parent=87 // pred_fallthru
          _
      $region88: #{tpu_custom_call.1} parent=5 // pred_fallthru
        _
    $region6: #{tpu_custom_call.1} parent=1 // loop_footer
      %s32 = sadd.s32 1, %s28
    $region7: #{tpu_custom_call.1} parent=1 // loop_footer_branch
      %27 = sbr.rel target = $region3
    $region8: #{tpu_custom_call.1} parent=1 // loop_exit
      _
    %2038 = vsyncpa [#allocation4], 1
    %s2039 = scalar_lea.sflag [#allocation4], 1
    %2040 = vsyncpa %s2039, 1
    %2041 = vsyncpa [#allocation11], 1
    %s2042 = scalar_lea.sflag [#allocation11], 1
    %2043 = vsyncpa %s2042, 1
    %2044 = vsyncpa [#allocation14], 1
    %s2045 = scalar_lea.sflag [#allocation14], 1
    %2046 = vsyncpa %s2045, 1
    %2047 = vsyncpa [#allocation5], 1
    %s2048 = scalar_lea.sflag [#allocation5], 1
    %2049 = vsyncpa %s2048, 1
    %2050 = vsyncpa [#allocation6], 1
    %s2051 = scalar_lea.sflag [#allocation6], 1
    %2052 = vsyncpa %s2051, 1
    %2053 = vsyncpa [#allocation8], 1

</llo_original>
